<compile_context>
chip_gen: v6e
topology: v6e:2x2x1
jax: 0.10.0
libtpu: 0.0.40
codegen_flags: <defaults>
</compile_context>

<pallas_src>
import functools

import jax
import jax.numpy as jnp
import numpy as np
from jax import lax
from jax.experimental import pallas as pl
from jax.experimental.pallas import tpu as pltpu


# ----------------------------------------------------------------------------
# Fused Pallas kernel (B_blk images per grid step, channel-major intermediates)
# ----------------------------------------------------------------------------
def _effi_unit_kernel(x_ref, w1_ref, b1_ref, wdw_ref, b2_ref, mask_ref,
                      wse1_ref, bse1_ref, wse2_ref, bse2_ref, bcast_ref,
                      w3_ref, b3_ref, o_ref,
                      *, K, H, W, B, residual, use_se):
    HW = H * W
    L = B * HW
    pad = K // 2

    # ---- assemble channel-major input slab (Cin, B*HW); per-image HW slices
    #      are lane-aligned when HW is a multiple of 128.
    if B == 1:
        xc = x_ref[0]                                       # (Cin, HW) f32
    else:
        xc = jnp.concatenate([x_ref[b] for b in range(B)], axis=1)   # (Cin, L)

    # ---- conv1: 1x1 (BN scale folded), bf16 MXU, channel-major out + ReLU
    y = jnp.dot(w1_ref[...], xc.astype(jnp.bfloat16),
                preferred_element_type=jnp.float32)          # (Cmid, L)
    y = jnp.maximum(y + b1_ref[...], 0.0)

    # ---- conv2: depthwise KxK, stride=1, pad=K//2 (BN folded) + ReLU.
    #      tap(dy,dx): XLU lane-roll of the flattened HW axis + 0/1 edge mask
    #      (masks the W-row wrap, top/bottom rows, and image boundaries).
    wdw = wdw_ref[...]                                       # (Cmid, K*K) f32
    acc = None
    for dy in range(K):
        for dx in range(K):
            t = dy * K + dx
            off = (dy - pad) * W + (dx - pad)                # read y[:, p + off]
            src = y if off == 0 else pltpu.roll(y, shift=(-off) % L, axis=1)
            if dy == pad and dx == pad:                      # center tap: mask == 1
                tap = src * wdw[:, t:t + 1]
            else:
                tap = src * mask_ref[t:t + 1, :] * wdw[:, t:t + 1]
            acc = tap if acc is None else acc + tap
    y = jnp.maximum(acc + b2_ref[...], 0.0)                  # (Cmid, L) f32

    # ---- SE: per-image global avg pool (NT matmul), tiny FCs, VPU broadcast
    if use_se:
        mid_se = wse2_ref.shape[1]
        pooled = lax.dot_general(y, bcast_ref[...],
                                 dimension_numbers=(((1,), (1,)), ((), ())),
                                 preferred_element_type=jnp.float32) * (1.0 / HW)
        # FC1 (K=Cmid) on the MXU.
        hdn = jnp.dot(wse1_ref[...], pooled,
                      preferred_element_type=jnp.float32) + bse1_ref[...]
        hdn = jnp.maximum(hdn, 0.0)                          # (mid_se, B)
        # FC2 (K=mid_se, degenerate matmul) on the VPU as outer-product FMAs.
        s = None
        for m in range(mid_se):
            part = wse2_ref[:, m:m + 1] * hdn[m:m + 1, :]
            s = part if s is None else s + part
        s = jax.nn.sigmoid(s + bse2_ref[...])                # (Cmid, B)
        # broadcast per-image scale back to pixels on the VPU (no K=B matmul)
        scale = None
        for b in range(B):
            part = s[:, b:b + 1] * bcast_ref[b:b + 1, :]
            scale = part if scale is None else scale + part
        y = y * scale

    # ---- conv3: 1x1 (BN folded), bf16 MXU, + bias (+ residual, f32)
    out = jnp.dot(w3_ref[...], y.astype(jnp.bfloat16),
                  preferred_element_type=jnp.float32)        # (Cout, L)
    out = out + b3_ref[...]
    if residual:
        out = out + xc

    # ---- lane-dense per-image stores back into the NCHW HBM layout
    for b in range(B):
        o_ref[b] = out[:, b * HW:(b + 1) * HW]


# ----------------------------------------------------------------------------
# One-time host-side preparation (hoisted out of the per-call path)
# ----------------------------------------------------------------------------
def _make_tap_masks(K, H, W, B):
    pad = K // 2
    q = np.arange(H * W)
    hh, ww = q // W, q % W
    masks = np.zeros((K * K, H * W), np.float32)
    for dy in range(K):
        for dx in range(K):
            valid = ((hh + dy - pad >= 0) & (hh + dy - pad < H) &
                     (ww + dx - pad >= 0) & (ww + dx - pad < W))
            masks[dy * K + dx] = valid.astype(np.float32)
    return np.tile(masks, (1, B))                            # (K*K, B*HW)


def choose_batch_block(n, cin, cout, cmid, hw, vmem_budget_bytes=8 << 20):
    """Largest divisor of n whose per-step working set fits a small VMEM budget."""
    per_image = 4 * hw * (3 * (cin + cout) + 6 * cmid)
    cap = max(1, vmem_budget_bytes // max(per_image, 1))
    b = max(1, min(n, cap))
    while n % b:
        b -= 1
    return b


def prepare_params(p, *, kernel_size, h, w, b_blk):
    """Fold BN scales, transpose for channel-major MXU use, build masks. Run once."""
    K = kernel_size
    hw = h * w
    f32 = jnp.float32
    w1t = (p["w1"] * p["scale1"][None, :]).T.astype(jnp.bfloat16)          # (Cmid, Cin)
    b1 = p["bias1"].reshape(-1, 1).astype(f32)                             # (Cmid, 1)
    wdw = (p["w_dw"] * p["scale2"][None, None, :]).reshape(K * K, -1).T.astype(f32)  # (Cmid, K*K)
    b2 = p["bias2"].reshape(-1, 1).astype(f32)                             # (Cmid, 1)
    masks = jnp.asarray(_make_tap_masks(K, h, w, b_blk))                   # (K*K, B*HW)
    wse1_t = p["w_se1"].T.astype(f32)                                      # (mid_se, Cmid)
    bse1 = p["b_se1"].reshape(-1, 1).astype(f32)                           # (mid_se, 1)
    wse2_t = p["w_se2"].T.astype(f32)                                      # (Cmid, mid_se)
    bse2 = p["b_se2"].reshape(-1, 1).astype(f32)                           # (Cmid, 1)
    bcast = jnp.asarray(np.kron(np.eye(b_blk, dtype=np.float32),
                                np.ones((1, hw), np.float32)))             # (B, B*HW)
    w3t = (p["w3"] * p["scale3"][None, :]).T.astype(jnp.bfloat16)          # (Cout, Cmid)
    b3 = p["bias3"].reshape(-1, 1).astype(f32)                             # (Cout, 1)
    return dict(b_blk=b_blk, w1t=w1t, b1=b1, wdw=wdw, b2=b2, masks=masks,
                wse1_t=wse1_t, bse1=bse1, wse2_t=wse2_t, bse2=bse2,
                bcast=bcast, w3t=w3t, b3=b3)


# ----------------------------------------------------------------------------
# Module forward (single pallas_call; only free reshapes on the host)
# ----------------------------------------------------------------------------
def effi_inv_res_unit(x_nchw, prep, *, kernel_size, stride, residual, use_se):
    assert stride == 1, "stride=1 only (residual config)"
    n, cin, h, w = x_nchw.shape
    hw = h * w
    b_blk = prep["b_blk"]
    assert n % b_blk == 0
    x = x_nchw.reshape(n, cin, hw).astype(jnp.float32)       # free reshape (NCHW)

    cmid = prep["w1t"].shape[0]
    cout = prep["w3t"].shape[0]
    mid_se = prep["wse1_t"].shape[0]
    kk = kernel_size * kernel_size
    l_blk = b_blk * hw

    kernel = functools.partial(_effi_unit_kernel, K=kernel_size, H=h, W=w,
                               B=b_blk, residual=residual, use_se=use_se)

    out = pl.pallas_call(
        kernel,
        out_shape=jax.ShapeDtypeStruct((n, cout, hw), jnp.float32),
        grid=(n // b_blk,),
        in_specs=[
            pl.BlockSpec((b_blk, cin, hw), lambda b: (b, 0, 0)),     # x (B_blk images)
            pl.BlockSpec((cmid, cin), lambda b: (0, 0)),             # w1^T (bf16, BN-folded)
            pl.BlockSpec((cmid, 1), lambda b: (0, 0)),               # b1
            pl.BlockSpec((cmid, kk), lambda b: (0, 0)),              # depthwise w (channel-major)
            pl.BlockSpec((cmid, 1), lambda b: (0, 0)),               # b2
            pl.BlockSpec((kk, l_blk), lambda b: (0, 0)),             # tap edge masks
            pl.BlockSpec((mid_se, cmid), lambda b: (0, 0)),          # SE fc1 w^T
            pl.BlockSpec((mid_se, 1), lambda b: (0, 0)),             # SE fc1 b
            pl.BlockSpec((cmid, mid_se), lambda b: (0, 0)),          # SE fc2 w^T
            pl.BlockSpec((cmid, 1), lambda b: (0, 0)),               # SE fc2 b
            pl.BlockSpec((b_blk, l_blk), lambda b: (0, 0)),          # per-image lane indicator
            pl.BlockSpec((cout, cmid), lambda b: (0, 0)),            # w3^T (bf16, BN-folded)
            pl.BlockSpec((cout, 1), lambda b: (0, 0)),               # b3
        ],
        out_specs=pl.BlockSpec((b_blk, cout, hw), lambda b: (b, 0, 0)),
        compiler_params=pltpu.CompilerParams(dimension_semantics=("parallel",)),
    )(x, prep["w1t"], prep["b1"], prep["wdw"], prep["b2"], prep["masks"],
      prep["wse1_t"], prep["bse1"], prep["wse2_t"], prep["bse2"],
      prep["bcast"], prep["w3t"], prep["b3"])

    return out.reshape(n, cout, h, w)                        # free reshape (NCHW)


# ----------------------------------------------------------------------------
# Pure-JAX reference for validation (unfolded parameters)
# ----------------------------------------------------------------------------
def reference(x_nchw, p, *, kernel_size, residual, use_se):
    x = jnp.transpose(x_nchw, (0, 2, 3, 1)).astype(jnp.float32)
    identity = x
    y = jnp.einsum("nhwc,cd->nhwd", x, p["w1"])
    y = jnp.maximum(y * p["scale1"] + p["bias1"], 0.0)
    k = kernel_size
    pad = k // 2
    cmid = y.shape[-1]
    y = jax.lax.conv_general_dilated(
        y, p["w_dw"].reshape(k, k, 1, cmid),
        window_strides=(1, 1), padding=[(pad, pad), (pad, pad)],
        dimension_numbers=("NHWC", "HWIO", "NHWC"),
        feature_group_count=cmid,
    )
    y = jnp.maximum(y * p["scale2"] + p["bias2"], 0.0)
    if use_se:
        pooled = jnp.mean(y, axis=(1, 2))
        hdn = jnp.maximum(pooled @ p["w_se1"] + p["b_se1"], 0.0)
        s = jax.nn.sigmoid(hdn @ p["w_se2"] + p["b_se2"])
        y = y * s[:, None, None, :]
    y = jnp.einsum("nhwc,cd->nhwd", y, p["w3"])
    y = y * p["scale3"] + p["bias3"]
    if residual:
        y = y + identity
    return jnp.transpose(y, (0, 3, 1, 2))


# ----------------------------------------------------------------------------
# Parameter init / main
# ----------------------------------------------------------------------------
def fold_bn(gamma, beta, mean, var, eps):
    scale = gamma / jnp.sqrt(var + eps)
    bias = beta - mean * scale
    return scale, bias


if __name__ == "__main__":
    # Module config
    N, Cin, H, W = 2, 8, 16, 16
    Cout = 8
    kernel_size, stride = 3, 1
    exp_factor, se_factor = 4, 4
    bn_eps = 1e-5
    Cmid = Cin * exp_factor                      # 32
    mid_se = Cmid // (exp_factor * se_factor)    # 2
    residual = (Cin == Cout) and (stride == 1)
    use_se = se_factor > 0

    key = jax.random.PRNGKey(0)
    keys = jax.random.split(key, 20)

    def normal(k, shape, scale=0.1):
        return scale * jax.random.normal(k, shape, dtype=jnp.float32)

    p = {}
    # conv1 (1x1) + BN1
    p["w1"] = normal(keys[0], (Cin, Cmid))
    g = 1.0 + 0.1 * jax.random.normal(keys[1], (Cmid,), dtype=jnp.float32)
    b = normal(keys[2], (Cmid,))
    m = normal(keys[3], (Cmid,))
    v = jax.random.uniform(keys[4], (Cmid,), minval=0.5, maxval=1.5, dtype=jnp.float32)
    p["scale1"], p["bias1"] = fold_bn(g, b, m, v, bn_eps)
    # conv2 (depthwise KxK) + BN2
    p["w_dw"] = normal(keys[5], (kernel_size, kernel_size, Cmid))
    g = 1.0 + 0.1 * jax.random.normal(keys[6], (Cmid,), dtype=jnp.float32)
    b = normal(keys[7], (Cmid,))
    m = normal(keys[8], (Cmid,))
    v = jax.random.uniform(keys[9], (Cmid,), minval=0.5, maxval=1.5, dtype=jnp.float32)
    p["scale2"], p["bias2"] = fold_bn(g, b, m, v, bn_eps)
    # SE block
    p["w_se1"] = normal(keys[10], (Cmid, mid_se))
    p["b_se1"] = normal(keys[11], (mid_se,))
    p["w_se2"] = normal(keys[12], (mid_se, Cmid))
    p["b_se2"] = normal(keys[13], (Cmid,))
    # conv3 (1x1) + BN3
    p["w3"] = normal(keys[14], (Cmid, Cout))
    g = 1.0 + 0.1 * jax.random.normal(keys[15], (Cout,), dtype=jnp.float32)
    b = normal(keys[16], (Cout,))
    m = normal(keys[17], (Cout,))
    v = jax.random.uniform(keys[18], (Cout,), minval=0.5, maxval=1.5, dtype=jnp.float32)
    p["scale3"], p["bias3"] = fold_bn(g, b, m, v, bn_eps)

    x = jax.random.normal(keys[19], (N, Cin, H, W), dtype=jnp.float32)

    # One-time prep (BN folding, transposes, masks), then the fused kernel.
    b_blk = choose_batch_block(N, Cin, Cout, Cmid, H * W)
    prep = prepare_params(p, kernel_size=kernel_size, h=H, w=W, b_blk=b_blk)

    out = effi_inv_res_unit(
        x, prep, kernel_size=kernel_size, stride=stride,
        residual=residual, use_se=use_se,
    )
    out = jax.block_until_ready(out)

    ref = reference(x, p, kernel_size=kernel_size, residual=residual, use_se=use_se)
    ref = jax.block_until_ready(ref)

    # bf16 matmul operands -> loosened tolerance (elementwise math stays f32).
    np.testing.assert_allclose(np.asarray(out), np.asarray(ref), rtol=2e-2, atol=2e-2)
    print("KERNEL_OK")
</pallas_src>

<mosaic_0001>
module attributes {stable_mosaic.version = 11 : i64} {
  func.func @_effi_unit_kernel(%arg0: i32, %arg1: memref<2x8x256xf32, #tpu.memory_space<vmem>>, %arg2: memref<32x8xbf16, #tpu.memory_space<vmem>>, %arg3: memref<32x1xf32, #tpu.memory_space<vmem>>, %arg4: memref<32x9xf32, #tpu.memory_space<vmem>>, %arg5: memref<32x1xf32, #tpu.memory_space<vmem>>, %arg6: memref<9x512xf32, #tpu.memory_space<vmem>>, %arg7: memref<2x32xf32, #tpu.memory_space<vmem>>, %arg8: memref<2x1xf32, #tpu.memory_space<vmem>>, %arg9: memref<32x2xf32, #tpu.memory_space<vmem>>, %arg10: memref<32x1xf32, #tpu.memory_space<vmem>>, %arg11: memref<2x512xf32, #tpu.memory_space<vmem>>, %arg12: memref<8x32xbf16, #tpu.memory_space<vmem>>, %arg13: memref<8x1xf32, #tpu.memory_space<vmem>>, %arg14: memref<2x8x256xf32, #tpu.memory_space<vmem>>) attributes {dimension_semantics = [#tpu.dimension_semantics<parallel>], iteration_bounds = array<i64: 1>, scalar_prefetch = 0 : i64, scratch_operands = 0 : i64, tpu.core_type = #tpu.core_type<tc>, window_params = [{transform_indices = @transform_0, window_bounds = array<i64: 2, 8, 256>}, {pipeline_mode = #tpu.pipeline_mode<synchronous>, transform_indices = @transform_1, window_bounds = array<i64: 32, 8>}, {pipeline_mode = #tpu.pipeline_mode<synchronous>, transform_indices = @transform_2, window_bounds = array<i64: 32, 1>}, {pipeline_mode = #tpu.pipeline_mode<synchronous>, transform_indices = @transform_3, window_bounds = array<i64: 32, 9>}, {pipeline_mode = #tpu.pipeline_mode<synchronous>, transform_indices = @transform_4, window_bounds = array<i64: 32, 1>}, {pipeline_mode = #tpu.pipeline_mode<synchronous>, transform_indices = @transform_5, window_bounds = array<i64: 9, 512>}, {pipeline_mode = #tpu.pipeline_mode<synchronous>, transform_indices = @transform_6, window_bounds = array<i64: 2, 32>}, {pipeline_mode = #tpu.pipeline_mode<synchronous>, transform_indices = @transform_7, window_bounds = array<i64: 2, 1>}, {pipeline_mode = #tpu.pipeline_mode<synchronous>, transform_indices = @transform_8, window_bounds = array<i64: 32, 2>}, {pipeline_mode = #tpu.pipeline_mode<synchronous>, transform_indices = @transform_9, window_bounds = array<i64: 32, 1>}, {pipeline_mode = #tpu.pipeline_mode<synchronous>, transform_indices = @transform_10, window_bounds = array<i64: 2, 512>}, {pipeline_mode = #tpu.pipeline_mode<synchronous>, transform_indices = @transform_11, window_bounds = array<i64: 8, 32>}, {pipeline_mode = #tpu.pipeline_mode<synchronous>, transform_indices = @transform_12, window_bounds = array<i64: 8, 1>}, {transform_indices = @transform_13, window_bounds = array<i64: 2, 8, 256>}]} {
    %c0 = arith.constant 0 : index
    %c0_0 = arith.constant 0 : index
    %c0_1 = arith.constant 0 : index
    %0 = vector.load %arg1[%c0, %c0_0, %c0_1] : memref<2x8x256xf32, #tpu.memory_space<vmem>>, vector<1x8x256xf32>
    %1 = vector.shape_cast %0 : vector<1x8x256xf32> to vector<8x256xf32>
    %c1 = arith.constant 1 : index
    %c0_2 = arith.constant 0 : index
    %c0_3 = arith.constant 0 : index
    %2 = vector.load %arg1[%c1, %c0_2, %c0_3] : memref<2x8x256xf32, #tpu.memory_space<vmem>>, vector<1x8x256xf32>
    %3 = vector.shape_cast %2 : vector<1x8x256xf32> to vector<8x256xf32>
    %4 = tpu.concatenate %1, %3 in 1 : vector<8x256xf32>, vector<8x256xf32> -> vector<8x512xf32>
    %c0_4 = arith.constant 0 : index
    %c0_5 = arith.constant 0 : index
    %5 = vector.load %arg2[%c0_4, %c0_5] : memref<32x8xbf16, #tpu.memory_space<vmem>>, vector<32x8xbf16>
    %6 = arith.truncf %4 : vector<8x512xf32> to vector<8x512xbf16>
    %cst = arith.constant dense<0.000000e+00> : vector<32x512xf32>
    %7 = tpu.matmul %5, %6, %cst {dimension_numbers = #tpu.dot_dimension_numbers<[1], [0], [0], [1], [0, 0, 1, 1], [], []>} : vector<32x8xbf16>, vector<8x512xbf16>, vector<32x512xf32> -> vector<32x512xf32>
    %c0_6 = arith.constant 0 : index
    %c0_7 = arith.constant 0 : index
    %8 = vector.load %arg3[%c0_6, %c0_7] : memref<32x1xf32, #tpu.memory_space<vmem>>, vector<32x1xf32>
    %9 = vector.broadcast %8 : vector<32x1xf32> to vector<32x512xf32>
    %10 = arith.addf %7, %9 : vector<32x512xf32>
    %cst_8 = arith.constant 0.000000e+00 : f32
    %11 = vector.broadcast %cst_8 : f32 to vector<32x512xf32>
    %12 = arith.maximumf %10, %11 : vector<32x512xf32>
    %c0_9 = arith.constant 0 : index
    %c0_10 = arith.constant 0 : index
    %13 = vector.load %arg4[%c0_9, %c0_10] : memref<32x9xf32, #tpu.memory_space<vmem>>, vector<32x9xf32>
    %c17_i32 = arith.constant 17 : i32
    %14 = tpu.dynamic_rotate %12 by %c17_i32 dim 1 : vector<32x512xf32>, i32 -> vector<32x512xf32>
    %c0_11 = arith.constant 0 : index
    %c0_12 = arith.constant 0 : index
    %15 = vector.load %arg6[%c0_11, %c0_12] : memref<9x512xf32, #tpu.memory_space<vmem>>, vector<1x512xf32>
    %16 = vector.broadcast %15 : vector<1x512xf32> to vector<32x512xf32>
    %17 = arith.mulf %14, %16 : vector<32x512xf32>
    %18 = vector.extract_strided_slice %13 {offsets = [0, 0], sizes = [32, 1], strides = [1, 1]} : vector<32x9xf32> to vector<32x1xf32>
    %19 = vector.broadcast %18 : vector<32x1xf32> to vector<32x512xf32>
    %20 = arith.mulf %17, %19 : vector<32x512xf32>
    %c16_i32 = arith.constant 16 : i32
    %21 = tpu.dynamic_rotate %12 by %c16_i32 dim 1 : vector<32x512xf32>, i32 -> vector<32x512xf32>
    %c1_13 = arith.constant 1 : index
    %c0_14 = arith.constant 0 : index
    %22 = vector.load %arg6[%c1_13, %c0_14] : memref<9x512xf32, #tpu.memory_space<vmem>>, vector<1x512xf32>
    %23 = vector.broadcast %22 : vector<1x512xf32> to vector<32x512xf32>
    %24 = arith.mulf %21, %23 : vector<32x512xf32>
    %25 = vector.extract_strided_slice %13 {offsets = [0, 1], sizes = [32, 1], strides = [1, 1]} : vector<32x9xf32> to vector<32x1xf32>
    %26 = vector.broadcast %25 : vector<32x1xf32> to vector<32x512xf32>
    %27 = arith.mulf %24, %26 : vector<32x512xf32>
    %28 = arith.addf %20, %27 : vector<32x512xf32>
    %c15_i32 = arith.constant 15 : i32
    %29 = tpu.dynamic_rotate %12 by %c15_i32 dim 1 : vector<32x512xf32>, i32 -> vector<32x512xf32>
    %c2 = arith.constant 2 : index
    %c0_15 = arith.constant 0 : index
    %30 = vector.load %arg6[%c2, %c0_15] : memref<9x512xf32, #tpu.memory_space<vmem>>, vector<1x512xf32>
    %31 = vector.broadcast %30 : vector<1x512xf32> to vector<32x512xf32>
    %32 = arith.mulf %29, %31 : vector<32x512xf32>
    %33 = vector.extract_strided_slice %13 {offsets = [0, 2], sizes = [32, 1], strides = [1, 1]} : vector<32x9xf32> to vector<32x1xf32>
    %34 = vector.broadcast %33 : vector<32x1xf32> to vector<32x512xf32>
    %35 = arith.mulf %32, %34 : vector<32x512xf32>
    %36 = arith.addf %28, %35 : vector<32x512xf32>
    %c1_i32 = arith.constant 1 : i32
    %37 = tpu.dynamic_rotate %12 by %c1_i32 dim 1 : vector<32x512xf32>, i32 -> vector<32x512xf32>
    %c3 = arith.constant 3 : index
    %c0_16 = arith.constant 0 : index
    %38 = vector.load %arg6[%c3, %c0_16] : memref<9x512xf32, #tpu.memory_space<vmem>>, vector<1x512xf32>
    %39 = vector.broadcast %38 : vector<1x512xf32> to vector<32x512xf32>
    %40 = arith.mulf %37, %39 : vector<32x512xf32>
    %41 = vector.extract_strided_slice %13 {offsets = [0, 3], sizes = [32, 1], strides = [1, 1]} : vector<32x9xf32> to vector<32x1xf32>
    %42 = vector.broadcast %41 : vector<32x1xf32> to vector<32x512xf32>
    %43 = arith.mulf %40, %42 : vector<32x512xf32>
    %44 = arith.addf %36, %43 : vector<32x512xf32>
    %45 = vector.extract_strided_slice %13 {offsets = [0, 4], sizes = [32, 1], strides = [1, 1]} : vector<32x9xf32> to vector<32x1xf32>
    %46 = vector.broadcast %45 : vector<32x1xf32> to vector<32x512xf32>
    %47 = arith.mulf %12, %46 : vector<32x512xf32>
    %48 = arith.addf %44, %47 : vector<32x512xf32>
    %c511_i32 = arith.constant 511 : i32
    %49 = tpu.dynamic_rotate %12 by %c511_i32 dim 1 : vector<32x512xf32>, i32 -> vector<32x512xf32>
    %c5 = arith.constant 5 : index
    %c0_17 = arith.constant 0 : index
    %50 = vector.load %arg6[%c5, %c0_17] : memref<9x512xf32, #tpu.memory_space<vmem>>, vector<1x512xf32>
    %51 = vector.broadcast %50 : vector<1x512xf32> to vector<32x512xf32>
    %52 = arith.mulf %49, %51 : vector<32x512xf32>
    %53 = vector.extract_strided_slice %13 {offsets = [0, 5], sizes = [32, 1], strides = [1, 1]} : vector<32x9xf32> to vector<32x1xf32>
    %54 = vector.broadcast %53 : vector<32x1xf32> to vector<32x512xf32>
    %55 = arith.mulf %52, %54 : vector<32x512xf32>
    %56 = arith.addf %48, %55 : vector<32x512xf32>
    %c497_i32 = arith.constant 497 : i32
    %57 = tpu.dynamic_rotate %12 by %c497_i32 dim 1 : vector<32x512xf32>, i32 -> vector<32x512xf32>
    %c6 = arith.constant 6 : index
    %c0_18 = arith.constant 0 : index
    %58 = vector.load %arg6[%c6, %c0_18] : memref<9x512xf32, #tpu.memory_space<vmem>>, vector<1x512xf32>
    %59 = vector.broadcast %58 : vector<1x512xf32> to vector<32x512xf32>
    %60 = arith.mulf %57, %59 : vector<32x512xf32>
    %61 = vector.extract_strided_slice %13 {offsets = [0, 6], sizes = [32, 1], strides = [1, 1]} : vector<32x9xf32> to vector<32x1xf32>
    %62 = vector.broadcast %61 : vector<32x1xf32> to vector<32x512xf32>
    %63 = arith.mulf %60, %62 : vector<32x512xf32>
    %64 = arith.addf %56, %63 : vector<32x512xf32>
    %c496_i32 = arith.constant 496 : i32
    %65 = tpu.dynamic_rotate %12 by %c496_i32 dim 1 : vector<32x512xf32>, i32 -> vector<32x512xf32>
    %c7 = arith.constant 7 : index
    %c0_19 = arith.constant 0 : index
    %66 = vector.load %arg6[%c7, %c0_19] : memref<9x512xf32, #tpu.memory_space<vmem>>, vector<1x512xf32>
    %67 = vector.broadcast %66 : vector<1x512xf32> to vector<32x512xf32>
    %68 = arith.mulf %65, %67 : vector<32x512xf32>
    %69 = vector.extract_strided_slice %13 {offsets = [0, 7], sizes = [32, 1], strides = [1, 1]} : vector<32x9xf32> to vector<32x1xf32>
    %70 = vector.broadcast %69 : vector<32x1xf32> to vector<32x512xf32>
    %71 = arith.mulf %68, %70 : vector<32x512xf32>
    %72 = arith.addf %64, %71 : vector<32x512xf32>
    %c495_i32 = arith.constant 495 : i32
    %73 = tpu.dynamic_rotate %12 by %c495_i32 dim 1 : vector<32x512xf32>, i32 -> vector<32x512xf32>
    %c8 = arith.constant 8 : index
    %c0_20 = arith.constant 0 : index
    %74 = vector.load %arg6[%c8, %c0_20] : memref<9x512xf32, #tpu.memory_space<vmem>>, vector<1x512xf32>
    %75 = vector.broadcast %74 : vector<1x512xf32> to vector<32x512xf32>
    %76 = arith.mulf %73, %75 : vector<32x512xf32>
    %77 = vector.extract_strided_slice %13 {offsets = [0, 8], sizes = [32, 1], strides = [1, 1]} : vector<32x9xf32> to vector<32x1xf32>
    %78 = vector.broadcast %77 : vector<32x1xf32> to vector<32x512xf32>
    %79 = arith.mulf %76, %78 : vector<32x512xf32>
    %80 = arith.addf %72, %79 : vector<32x512xf32>
    %c0_21 = arith.constant 0 : index
    %c0_22 = arith.constant 0 : index
    %81 = vector.load %arg5[%c0_21, %c0_22] : memref<32x1xf32, #tpu.memory_space<vmem>>, vector<32x1xf32>
    %82 = vector.broadcast %81 : vector<32x1xf32> to vector<32x512xf32>
    %83 = arith.addf %80, %82 : vector<32x512xf32>
    %cst_23 = arith.constant 0.000000e+00 : f32
    %84 = vector.broadcast %cst_23 : f32 to vector<32x512xf32>
    %85 = arith.maximumf %83, %84 : vector<32x512xf32>
    %c0_24 = arith.constant 0 : index
    %c0_25 = arith.constant 0 : index
    %86 = vector.load %arg11[%c0_24, %c0_25] : memref<2x512xf32, #tpu.memory_space<vmem>>, vector<2x512xf32>
    %cst_26 = arith.constant dense<0.000000e+00> : vector<32x2xf32>
    %87 = tpu.matmul %85, %86, %cst_26 {dimension_numbers = #tpu.dot_dimension_numbers<[1], [1], [0], [0], [0, 0, 1, 0], [], []>} : vector<32x512xf32>, vector<2x512xf32>, vector<32x2xf32> -> vector<32x2xf32>
    %cst_27 = arith.constant 3.906250e-03 : f32
    %88 = vector.broadcast %cst_27 : f32 to vector<32x2xf32>
    %89 = arith.mulf %87, %88 : vector<32x2xf32>
    %c0_28 = arith.constant 0 : index
    %c0_29 = arith.constant 0 : index
    %90 = vector.load %arg7[%c0_28, %c0_29] : memref<2x32xf32, #tpu.memory_space<vmem>>, vector<2x32xf32>
    %cst_30 = arith.constant dense<0.000000e+00> : vector<2x2xf32>
    %91 = tpu.matmul %90, %89, %cst_30 {dimension_numbers = #tpu.dot_dimension_numbers<[1], [0], [0], [1], [0, 0, 1, 1], [], []>} : vector<2x32xf32>, vector<32x2xf32>, vector<2x2xf32> -> vector<2x2xf32>
    %c0_31 = arith.constant 0 : index
    %c0_32 = arith.constant 0 : index
    %92 = vector.load %arg8[%c0_31, %c0_32] : memref<2x1xf32, #tpu.memory_space<vmem>>, vector<2x1xf32>
    %93 = vector.broadcast %92 : vector<2x1xf32> to vector<2x2xf32>
    %94 = arith.addf %91, %93 : vector<2x2xf32>
    %cst_33 = arith.constant 0.000000e+00 : f32
    %95 = vector.broadcast %cst_33 : f32 to vector<2x2xf32>
    %96 = arith.maximumf %94, %95 : vector<2x2xf32>
    %c0_34 = arith.constant 0 : index
    %c0_35 = arith.constant 0 : index
    %97 = vector.load %arg9[%c0_34, %c0_35] : memref<32x2xf32, #tpu.memory_space<vmem>>, vector<32x1xf32>
    %98 = vector.extract_strided_slice %96 {offsets = [0, 0], sizes = [1, 2], strides = [1, 1]} : vector<2x2xf32> to vector<1x2xf32>
    %99 = vector.broadcast %97 : vector<32x1xf32> to vector<32x2xf32>
    %100 = vector.broadcast %98 : vector<1x2xf32> to vector<32x2xf32>
    %101 = arith.mulf %99, %100 : vector<32x2xf32>
    %c0_36 = arith.constant 0 : index
    %c1_37 = arith.constant 1 : index
    %102 = vector.load %arg9[%c0_36, %c1_37] : memref<32x2xf32, #tpu.memory_space<vmem>>, vector<32x1xf32>
    %103 = vector.extract_strided_slice %96 {offsets = [1, 0], sizes = [1, 2], strides = [1, 1]} : vector<2x2xf32> to vector<1x2xf32>
    %104 = vector.broadcast %102 : vector<32x1xf32> to vector<32x2xf32>
    %105 = vector.broadcast %103 : vector<1x2xf32> to vector<32x2xf32>
    %106 = arith.mulf %104, %105 : vector<32x2xf32>
    %107 = arith.addf %101, %106 : vector<32x2xf32>
    %c0_38 = arith.constant 0 : index
    %c0_39 = arith.constant 0 : index
    %108 = vector.load %arg10[%c0_38, %c0_39] : memref<32x1xf32, #tpu.memory_space<vmem>>, vector<32x1xf32>
    %109 = vector.broadcast %108 : vector<32x1xf32> to vector<32x2xf32>
    %110 = arith.addf %107, %109 : vector<32x2xf32>
    %111 = arith.negf %110 : vector<32x2xf32>
    %112 = math.exp %111 : vector<32x2xf32>
    %cst_40 = arith.constant 1.000000e+00 : f32
    %113 = vector.broadcast %cst_40 : f32 to vector<32x2xf32>
    %114 = arith.addf %113, %112 : vector<32x2xf32>
    %115 = arith.divf %113, %114 : vector<32x2xf32>
    %116 = vector.extract_strided_slice %115 {offsets = [0, 0], sizes = [32, 1], strides = [1, 1]} : vector<32x2xf32> to vector<32x1xf32>
    %c0_41 = arith.constant 0 : index
    %c0_42 = arith.constant 0 : index
    %117 = vector.load %arg11[%c0_41, %c0_42] : memref<2x512xf32, #tpu.memory_space<vmem>>, vector<1x512xf32>
    %118 = vector.broadcast %116 : vector<32x1xf32> to vector<32x512xf32>
    %119 = vector.broadcast %117 : vector<1x512xf32> to vector<32x512xf32>
    %120 = arith.mulf %118, %119 : vector<32x512xf32>
    %121 = vector.extract_strided_slice %115 {offsets = [0, 1], sizes = [32, 1], strides = [1, 1]} : vector<32x2xf32> to vector<32x1xf32>
    %c1_43 = arith.constant 1 : index
    %c0_44 = arith.constant 0 : index
    %122 = vector.load %arg11[%c1_43, %c0_44] : memref<2x512xf32, #tpu.memory_space<vmem>>, vector<1x512xf32>
    %123 = vector.broadcast %121 : vector<32x1xf32> to vector<32x512xf32>
    %124 = vector.broadcast %122 : vector<1x512xf32> to vector<32x512xf32>
    %125 = arith.mulf %123, %124 : vector<32x512xf32>
    %126 = arith.addf %120, %125 : vector<32x512xf32>
    %127 = arith.mulf %85, %126 : vector<32x512xf32>
    %c0_45 = arith.constant 0 : index
    %c0_46 = arith.constant 0 : index
    %128 = vector.load %arg12[%c0_45, %c0_46] : memref<8x32xbf16, #tpu.memory_space<vmem>>, vector<8x32xbf16>
    %129 = arith.truncf %127 : vector<32x512xf32> to vector<32x512xbf16>
    %cst_47 = arith.constant dense<0.000000e+00> : vector<8x512xf32>
    %130 = tpu.matmul %128, %129, %cst_47 {dimension_numbers = #tpu.dot_dimension_numbers<[1], [0], [0], [1], [0, 0, 1, 1], [], []>} : vector<8x32xbf16>, vector<32x512xbf16>, vector<8x512xf32> -> vector<8x512xf32>
    %c0_48 = arith.constant 0 : index
    %c0_49 = arith.constant 0 : index
    %131 = vector.load %arg13[%c0_48, %c0_49] : memref<8x1xf32, #tpu.memory_space<vmem>>, vector<8x1xf32>
    %132 = vector.broadcast %131 : vector<8x1xf32> to vector<8x512xf32>
    %133 = arith.addf %130, %132 : vector<8x512xf32>
    %134 = arith.addf %133, %4 : vector<8x512xf32>
    %135 = vector.extract_strided_slice %134 {offsets = [0, 0], sizes = [8, 256], strides = [1, 1]} : vector<8x512xf32> to vector<8x256xf32>
    %c0_50 = arith.constant 0 : index
    %c0_51 = arith.constant 0 : index
    %c0_52 = arith.constant 0 : index
    %136 = vector.load %arg14[%c0_50, %c0_51, %c0_52] : memref<2x8x256xf32, #tpu.memory_space<vmem>>, vector<1x8x256xf32>
    %137 = vector.shape_cast %136 : vector<1x8x256xf32> to vector<8x256xf32>
    %138 = vector.shape_cast %135 : vector<8x256xf32> to vector<1x8x256xf32>
    tpu.vector_store %arg14[%c0_50, %c0_51, %c0_52], %138 {strides = array<i32>} : memref<2x8x256xf32, #tpu.memory_space<vmem>>, vector<1x8x256xf32>,
    %139 = vector.extract_strided_slice %134 {offsets = [0, 256], sizes = [8, 256], strides = [1, 1]} : vector<8x512xf32> to vector<8x256xf32>
    %c1_53 = arith.constant 1 : index
    %c0_54 = arith.constant 0 : index
    %c0_55 = arith.constant 0 : index
    %140 = vector.load %arg14[%c1_53, %c0_54, %c0_55] : memref<2x8x256xf32, #tpu.memory_space<vmem>>, vector<1x8x256xf32>
    %141 = vector.shape_cast %140 : vector<1x8x256xf32> to vector<8x256xf32>
    %142 = vector.shape_cast %139 : vector<8x256xf32> to vector<1x8x256xf32>
    tpu.vector_store %arg14[%c1_53, %c0_54, %c0_55], %142 {strides = array<i32>} : memref<2x8x256xf32, #tpu.memory_space<vmem>>, vector<1x8x256xf32>,
    return
  }
  func.func @transform_0(%arg0: i32) -> (i32, i32, i32) {
    %c0_i32 = arith.constant 0 : i32
    %c0_i32_0 = arith.constant 0 : i32
    %c0_i32_1 = arith.constant 0 : i32
    return %arg0, %c0_i32, %c0_i32_0 : i32, i32, i32
  }
  func.func @transform_1(%arg0: i32) -> (i32, i32) {
    %c0_i32 = arith.constant 0 : i32
    %c0_i32_0 = arith.constant 0 : i32
    %c0_i32_1 = arith.constant 0 : i32
    return %c0_i32, %c0_i32_0 : i32, i32
  }
  func.func @transform_2(%arg0: i32) -> (i32, i32) {
    %c0_i32 = arith.constant 0 : i32
    %c0_i32_0 = arith.constant 0 : i32
    %c0_i32_1 = arith.constant 0 : i32
    return %c0_i32, %c0_i32_0 : i32, i32
  }
  func.func @transform_3(%arg0: i32) -> (i32, i32) {
    %c0_i32 = arith.constant 0 : i32
    %c0_i32_0 = arith.constant 0 : i32
    %c0_i32_1 = arith.constant 0 : i32
    return %c0_i32, %c0_i32_0 : i32, i32
  }
  func.func @transform_4(%arg0: i32) -> (i32, i32) {
    %c0_i32 = arith.constant 0 : i32
    %c0_i32_0 = arith.constant 0 : i32
    %c0_i32_1 = arith.constant 0 : i32
    return %c0_i32, %c0_i32_0 : i32, i32
  }
  func.func @transform_5(%arg0: i32) -> (i32, i32) {
    %c0_i32 = arith.constant 0 : i32
    %c0_i32_0 = arith.constant 0 : i32
    %c0_i32_1 = arith.constant 0 : i32
    return %c0_i32, %c0_i32_0 : i32, i32
  }
  func.func @transform_6(%arg0: i32) -> (i32, i32) {
    %c0_i32 = arith.constant 0 : i32
    %c0_i32_0 = arith.constant 0 : i32
    %c0_i32_1 = arith.constant 0 : i32
    return %c0_i32, %c0_i32_0 : i32, i32
  }
  func.func @transform_7(%arg0: i32) -> (i32, i32) {
    %c0_i32 = arith.constant 0 : i32
    %c0_i32_0 = arith.constant 0 : i32
    %c0_i32_1 = arith.constant 0 : i32
    return %c0_i32, %c0_i32_0 : i32, i32
  }
  func.func @transform_8(%arg0: i32) -> (i32, i32) {
    %c0_i32 = arith.constant 0 : i32
    %c0_i32_0 = arith.constant 0 : i32
    %c0_i32_1 = arith.constant 0 : i32
    return %c0_i32, %c0_i32_0 : i32, i32
  }
  func.func @transform_9(%arg0: i32) -> (i32, i32) {
    %c0_i32 = arith.constant 0 : i32
    %c0_i32_0 = arith.constant 0 : i32
    %c0_i32_1 = arith.constant 0 : i32
    return %c0_i32, %c0_i32_0 : i32, i32
  }
  func.func @transform_10(%arg0: i32) -> (i32, i32) {
    %c0_i32 = arith.constant 0 : i32
    %c0_i32_0 = arith.constant 0 : i32
    %c0_i32_1 = arith.constant 0 : i32
    return %c0_i32, %c0_i32_0 : i32, i32
  }
  func.func @transform_11(%arg0: i32) -> (i32, i32) {
    %c0_i32 = arith.constant 0 : i32
    %c0_i32_0 = arith.constant 0 : i32
    %c0_i32_1 = arith.constant 0 : i32
    return %c0_i32, %c0_i32_0 : i32, i32
  }
  func.func @transform_12(%arg0: i32) -> (i32, i32) {
    %c0_i32 = arith.constant 0 : i32
    %c0_i32_0 = arith.constant 0 : i32
    %c0_i32_1 = arith.constant 0 : i32
    return %c0_i32, %c0_i32_0 : i32, i32
  }
  func.func @transform_13(%arg0: i32) -> (i32, i32, i32) {
    %c0_i32 = arith.constant 0 : i32
    %c0_i32_0 = arith.constant 0 : i32
    %c0_i32_1 = arith.constant 0 : i32
    return %arg0, %c0_i32, %c0_i32_0 : i32, i32, i32
  }
}

</mosaic_0001>

<llo_original>
// kernel: tpu_custom_call.1
$region0: #{tpu_custom_call.1}
  #allocation0 [shape = 'u32[]', space=smem, size = 0x4, offset = 0x4, fixed_abs, tag = 'smem constant byte address 0x4 - core index']
  #allocation1 [shape = 'u32[144,128]{1,0:T(1,128)}', space=vmem, size = 0x12000, scoped, tag = 'internal scratch']
  %s0 = inlined_call_operand.vmem [shape: f32[2,8,256], index: 0, kind: input, shape index: {}]
  %s1 = inlined_call_operand.vmem [shape: bf16[32,8], index: 1, kind: input, shape index: {}]
  %s2 = inlined_call_operand.vmem [shape: f32[32,1], index: 2, kind: input, shape index: {}]
  %s3 = inlined_call_operand.vmem [shape: f32[32,9], index: 3, kind: input, shape index: {}]
  %s4 = inlined_call_operand.vmem [shape: f32[32,1], index: 4, kind: input, shape index: {}]
  %s5 = inlined_call_operand.vmem [shape: f32[9,512], index: 5, kind: input, shape index: {}]
  %s6 = inlined_call_operand.vmem [shape: f32[2,32], index: 6, kind: input, shape index: {}]
  %s7 = inlined_call_operand.vmem [shape: f32[2,1], index: 7, kind: input, shape index: {}]
  %s8 = inlined_call_operand.vmem [shape: f32[32,2], index: 8, kind: input, shape index: {}]
  %s9 = inlined_call_operand.vmem [shape: f32[32,1], index: 9, kind: input, shape index: {}]
  %s10 = inlined_call_operand.vmem [shape: f32[2,512], index: 10, kind: input, shape index: {}]
  %s11 = inlined_call_operand.vmem [shape: bf16[8,32], index: 11, kind: input, shape index: {}]
  %s12 = inlined_call_operand.vmem [shape: f32[8,1], index: 12, kind: input, shape index: {}]
  %s13 = inlined_call_operand.hbm [shape: f32[2,8,256], index: 13, kind: output, shape index: {}]
  %s14 = sld [smem:[#allocation0]]
  $region62: #{tpu_custom_call.1} parent=0
    _
  %s16 = ssub.s32 1, %s14
  %s17 = scalar_select 0, %s16, %s14
  $region1: #{tpu_custom_call.1} parent=0
    #allocation2 [shape = 'u8[16384]{0}', space=vmem, size = 0x4000, scoped, tag = 'output window, operand 0, single buffered']
    #allocation3 [shape = 's32[1]{0}', space=sflag, size = 0x4, scoped, tag = 'scoped memory for tpu_custom_call.1']
    %18 = vsyncpa [#allocation3], 0
    // Predicated region
    $region2: #{tpu_custom_call.1} parent=1 // pred_check
      _
    $region3: #{tpu_custom_call.1} parent=1 // pred_check_branch
      %20 = sbr.rel (0) target = $region5
    $region4: #{tpu_custom_call.1} parent=1 // pred_region
      _
    $region5: #{tpu_custom_call.1} parent=1 // pred_fallthru
      _
    // Predicated region
    $region6: #{tpu_custom_call.1} parent=1 // pred_check
      _
    $region7: #{tpu_custom_call.1} parent=1 // pred_check_branch
      %22 = sbr.rel (0) target = $region9
    $region8: #{tpu_custom_call.1} parent=1 // pred_region
      _
    $region9: #{tpu_custom_call.1} parent=1 // pred_fallthru
      _
    // Predicated region
    $region10: #{tpu_custom_call.1} parent=1 // pred_check
      _
    $region11: #{tpu_custom_call.1} parent=1 // pred_check_branch
      %24 = sbr.rel (0) target = $region13
    $region12: #{tpu_custom_call.1} parent=1 // pred_region
      _
    $region13: #{tpu_custom_call.1} parent=1 // pred_fallthru
      _
    // Predicated region
    $region14: #{tpu_custom_call.1} parent=1 // pred_check
      _
    $region15: #{tpu_custom_call.1} parent=1 // pred_check_branch
      %26 = sbr.rel (0) target = $region17
    $region16: #{tpu_custom_call.1} parent=1 // pred_region
      _
    $region17: #{tpu_custom_call.1} parent=1 // pred_fallthru
      _
    // Predicated region
    $region18: #{tpu_custom_call.1} parent=1 // pred_check
      _
    $region19: #{tpu_custom_call.1} parent=1 // pred_check_branch
      %28 = sbr.rel (0) target = $region21
    $region20: #{tpu_custom_call.1} parent=1 // pred_region
      _
    $region21: #{tpu_custom_call.1} parent=1 // pred_fallthru
      _
    // Predicated region
    $region22: #{tpu_custom_call.1} parent=1 // pred_check
      _
    $region23: #{tpu_custom_call.1} parent=1 // pred_check_branch
      %30 = sbr.rel (0) target = $region25
    $region24: #{tpu_custom_call.1} parent=1 // pred_region
      _
    $region25: #{tpu_custom_call.1} parent=1 // pred_fallthru
      _
    // Predicated region
    $region26: #{tpu_custom_call.1} parent=1 // pred_check
      _
    $region27: #{tpu_custom_call.1} parent=1 // pred_check_branch
      %32 = sbr.rel (0) target = $region29
    $region28: #{tpu_custom_call.1} parent=1 // pred_region
      _
    $region29: #{tpu_custom_call.1} parent=1 // pred_fallthru
      _
    // Predicated region
    $region30: #{tpu_custom_call.1} parent=1 // pred_check
      _
    $region31: #{tpu_custom_call.1} parent=1 // pred_check_branch
      %34 = sbr.rel (0) target = $region33
    $region32: #{tpu_custom_call.1} parent=1 // pred_region
      _
    $region33: #{tpu_custom_call.1} parent=1 // pred_fallthru
      _
    // Predicated region
    $region34: #{tpu_custom_call.1} parent=1 // pred_check
      _
    $region35: #{tpu_custom_call.1} parent=1 // pred_check_branch
      %36 = sbr.rel (0) target = $region37
    $region36: #{tpu_custom_call.1} parent=1 // pred_region
      _
    $region37: #{tpu_custom_call.1} parent=1 // pred_fallthru
      _
    // Predicated region
    $region38: #{tpu_custom_call.1} parent=1 // pred_check
      _
    $region39: #{tpu_custom_call.1} parent=1 // pred_check_branch
      %38 = sbr.rel (0) target = $region41
    $region40: #{tpu_custom_call.1} parent=1 // pred_region
      _
    $region41: #{tpu_custom_call.1} parent=1 // pred_fallthru
      _
    // Predicated region
    $region42: #{tpu_custom_call.1} parent=1 // pred_check
      _
    $region43: #{tpu_custom_call.1} parent=1 // pred_check_branch
      %40 = sbr.rel (0) target = $region45
    $region44: #{tpu_custom_call.1} parent=1 // pred_region
      _
    $region45: #{tpu_custom_call.1} parent=1 // pred_fallthru
      _
    // Predicated region
    $region46: #{tpu_custom_call.1} parent=1 // pred_check
      _
    $region47: #{tpu_custom_call.1} parent=1 // pred_check_branch
      %42 = sbr.rel (0) target = $region49
    $region48: #{tpu_custom_call.1} parent=1 // pred_region
      _
    $region49: #{tpu_custom_call.1} parent=1 // pred_fallthru
      _
    // Predicated region
    $region50: #{tpu_custom_call.1} parent=1 // pred_check
      _
    $region51: #{tpu_custom_call.1} parent=1 // pred_check_branch
      %44 = sbr.rel (0) target = $region53
    $region52: #{tpu_custom_call.1} parent=1 // pred_region
      _
    $region53: #{tpu_custom_call.1} parent=1 // pred_fallthru
      _
    %v46 = vld [vmem:[%s0] sm:$0xff]
    %v47 = vld [vmem:[%s0 + $0x8] sm:$0xff]
    %s48 = scalar_lea.vmem %s0, 16
    %v49 = vld [vmem:[%s48] sm:$0xff]
    %v50 = vld [vmem:[%s48 + $0x8] sm:$0xff]
    %v51 = vld [vmem:[%s1] sm:$0xf]
    %v52 = vld [vmem:[%s1 + $0x4] sm:$0xf]
    %v53 = vld [vmem:[%s1 + $0x8] sm:$0xf]
    %v54 = vld [vmem:[%s1 + $0xc] sm:$0xf]
    %v55 = vpack.c.bf16 %v46, %v46
    %v56 = vpack.c.bf16 %v47, %v47
    %v57 = vpack.c.bf16 %v49, %v49
    %v58 = vpack.c.bf16 %v50, %v50
    %v59 = vld [vmem:[%s2] sm:$0xff]
    %v60 = vld [vmem:[%s2 + $0x8] sm:$0xff]
    %v61 = vld [vmem:[%s2 + $0x10] sm:$0xff]
    %v62 = vld [vmem:[%s2 + $0x18] sm:$0xff]
    %64 = vset.pattern.permute.xlu0 0
    %65 = vperm.xlu0 %64, %v59
    %v66 = vpop.permute.xlu0 %65
    %69 = vset.pattern.permute.xlu0 0
    %70 = vperm.xlu0 %69, %v60
    %v71 = vpop.permute.xlu0 %70
    %74 = vset.pattern.permute.xlu0 0
    %75 = vperm.xlu0 %74, %v61
    %v76 = vpop.permute.xlu0 %75
    %79 = vset.pattern.permute.xlu0 0
    %80 = vperm.xlu0 %79, %v62
    %v81 = vpop.permute.xlu0 %80
    %v87 = vunpack.c.l.b16 %v51
    %v88 = vunpack.c.l.b16 %v52
    %v89 = vunpack.c.l.b16 %v53
    %v90 = vunpack.c.l.b16 %v54
    %v91 = vpack.c.b16 %v88, %v87
    %v92 = vpack.c.b16 %v90, %v89
    %vm93 = vcmask 64512
    %v95 = vsel %vm93, %v91, 0
    %v98 = vsel %vm93, %v92, 0
    %vm100 = vcmask 1043456
    %v102 = vsel %vm100, %v55, 0
    %v105 = vsel %vm100, %v56, 0
    %v108 = vsel %vm100, %v57, 0
    %v111 = vsel %vm100, %v58, 0
    %113 = vmatprep.subr.bf16.mxu0 0
    %114 = vmatpush1.bf16.msra.mxu0 0
    %115 = vmatprep.subr.bf16.mxu0 0
    %116 = vmatpush1.bf16.msra.mxu0 0
    %117 = vmatprep.subr.bf16.mxu0 0
    %118 = vmatpush1.bf16.msra.mxu0 0
    %119 = vmatprep.subr.bf16.mxu0 0
    %120 = vmatpush1.bf16.msra.mxu0 0
    %121 = vmatprep.subr.bf16.mxu0 0
    %122 = vmatpush1.bf16.msra.mxu0 0
    %123 = vmatprep.subr.bf16.mxu0 0
    %124 = vmatpush1.bf16.msra.mxu0 0
    %125 = vmatprep.subr.bf16.mxu0 0
    %126 = vmatpush1.bf16.msra.mxu0 0
    %127 = vmatprep.subr.bf16.mxu0 %v105
    %128 = vmatpush1.bf16.msra.mxu0 %v102
    %129 = vmatprep.subr.bf16.mxu0 0
    %130 = vmatpush2.bf16.msra.mxu0 0
    %131 = vmatprep.subr.bf16.mxu0 0
    %132 = vmatpush2.bf16.msra.mxu0 0
    %133 = vmatprep.subr.bf16.mxu0 0
    %134 = vmatpush2.bf16.msra.mxu0 0
    %135 = vmatprep.subr.bf16.mxu0 0
    %136 = vmatpush2.bf16.msra.mxu0 0
    %137 = vmatprep.subr.bf16.mxu0 0
    %138 = vmatpush2.bf16.msra.mxu0 0
    %139 = vmatprep.subr.bf16.mxu0 0
    %140 = vmatpush2.bf16.msra.mxu0 0
    %141 = vmatprep.subr.bf16.mxu0 0
    %142 = vmatpush2.bf16.msra.mxu0 0
    %143 = vmatprep.subr.bf16.mxu0 0
    %144 = vmatpush2.bf16.msra.mxu0 0
    %145 = vmatprep.mubr.bf16.mxu0 0
    %146 = vmatmul.mubr.bf16.gmra.mxu0 %v95
    %v147 = vpop.f32.mrf.mxu0
    %v148 = vadd.f32 %v66, %v147
    %v149 = vpop.f32.mrf.mxu0
    %v150 = vadd.f32 %v66, %v149
    %v151 = vpop.f32.mrf.mxu0
    %v152 = vadd.f32 %v71, %v151
    %v153 = vpop.f32.mrf.mxu0
    %v154 = vadd.f32 %v71, %v153
    %155 = vmatprep.mubr.bf16.mxu0 0
    %156 = vmatmul.mubr.bf16.gmra.mxu0 %v98
    %v157 = vpop.f32.mrf.mxu0
    %v158 = vadd.f32 %v76, %v157
    %v159 = vpop.f32.mrf.mxu0
    %v160 = vadd.f32 %v76, %v159
    %v161 = vpop.f32.mrf.mxu0
    %v162 = vadd.f32 %v81, %v161
    %v163 = vpop.f32.mrf.mxu0
    %v164 = vadd.f32 %v81, %v163
    %165 = vdwg.mxu0
    %166 = vmatprep.subr.bf16.mxu0 0
    %167 = vmatpush1.bf16.msra.mxu0 0
    %168 = vmatprep.subr.bf16.mxu0 0
    %169 = vmatpush1.bf16.msra.mxu0 0
    %170 = vmatprep.subr.bf16.mxu0 0
    %171 = vmatpush1.bf16.msra.mxu0 0
    %172 = vmatprep.subr.bf16.mxu0 0
    %173 = vmatpush1.bf16.msra.mxu0 0
    %174 = vmatprep.subr.bf16.mxu0 0
    %175 = vmatpush1.bf16.msra.mxu0 0
    %176 = vmatprep.subr.bf16.mxu0 0
    %177 = vmatpush1.bf16.msra.mxu0 0
    %178 = vmatprep.subr.bf16.mxu0 0
    %179 = vmatpush1.bf16.msra.mxu0 0
    %180 = vmatprep.subr.bf16.mxu0 %v111
    %181 = vmatpush1.bf16.msra.mxu0 %v108
    %182 = vmatprep.subr.bf16.mxu0 0
    %183 = vmatpush2.bf16.msra.mxu0 0
    %184 = vmatprep.subr.bf16.mxu0 0
    %185 = vmatpush2.bf16.msra.mxu0 0
    %186 = vmatprep.subr.bf16.mxu0 0
    %187 = vmatpush2.bf16.msra.mxu0 0
    %188 = vmatprep.subr.bf16.mxu0 0
    %189 = vmatpush2.bf16.msra.mxu0 0
    %190 = vmatprep.subr.bf16.mxu0 0
    %191 = vmatpush2.bf16.msra.mxu0 0
    %192 = vmatprep.subr.bf16.mxu0 0
    %193 = vmatpush2.bf16.msra.mxu0 0
    %194 = vmatprep.subr.bf16.mxu0 0
    %195 = vmatpush2.bf16.msra.mxu0 0
    %196 = vmatprep.subr.bf16.mxu0 0
    %197 = vmatpush2.bf16.msra.mxu0 0
    %198 = vmatprep.mubr.bf16.mxu0 0
    %199 = vmatmul.mubr.bf16.gmra.mxu0 %v95
    %v200 = vpop.f32.mrf.mxu0
    %v201 = vadd.f32 %v66, %v200
    %v202 = vpop.f32.mrf.mxu0
    %v203 = vadd.f32 %v66, %v202
    %v204 = vpop.f32.mrf.mxu0
    %v205 = vadd.f32 %v71, %v204
    %v206 = vpop.f32.mrf.mxu0
    %v207 = vadd.f32 %v71, %v206
    %208 = vmatprep.mubr.bf16.mxu0 0
    %209 = vmatmul.mubr.bf16.gmra.mxu0 %v98
    %v210 = vpop.f32.mrf.mxu0
    %v211 = vadd.f32 %v76, %v210
    %v212 = vpop.f32.mrf.mxu0
    %v213 = vadd.f32 %v76, %v212
    %v214 = vpop.f32.mrf.mxu0
    %v215 = vadd.f32 %v81, %v214
    %v216 = vpop.f32.mrf.mxu0
    %v217 = vadd.f32 %v81, %v216
    %218 = vdwg.mxu0
    %v219 = vmax.f32 %v148, 0.0
    %v220 = vmax.f32 %v150, 0.0
    %v221 = vmax.f32 %v201, 0.0
    %v222 = vmax.f32 %v203, 0.0
    %v223 = vmax.f32 %v152, 0.0
    %v224 = vmax.f32 %v154, 0.0
    %v225 = vmax.f32 %v205, 0.0
    %v226 = vmax.f32 %v207, 0.0
    %v227 = vmax.f32 %v158, 0.0
    %v228 = vmax.f32 %v160, 0.0
    %v229 = vmax.f32 %v211, 0.0
    %v230 = vmax.f32 %v213, 0.0
    %v231 = vmax.f32 %v162, 0.0
    %v232 = vmax.f32 %v164, 0.0
    %v233 = vmax.f32 %v215, 0.0
    %v234 = vmax.f32 %v217, 0.0
    %v235 = vld [vmem:[%s3] sm:$0xff]
    %v236 = vld [vmem:[%s3 + $0x8] sm:$0xff]
    %v237 = vld [vmem:[%s3 + $0x10] sm:$0xff]
    %v238 = vld [vmem:[%s3 + $0x18] sm:$0xff]
    %239 = vrot.lane.b32.xlu0 %v219, 17
    %v240 = vpop.permute.xlu0 %239
    %241 = vrot.lane.b32.xlu0 %v223, 17
    %v242 = vpop.permute.xlu0 %241
    %243 = vrot.lane.b32.xlu0 %v227, 17
    %v244 = vpop.permute.xlu0 %243
    %245 = vrot.lane.b32.xlu0 %v231, 17
    %v246 = vpop.permute.xlu0 %245
    %247 = vrot.lane.b32.xlu0 %v220, 17
    %v248 = vpop.permute.xlu0 %247
    %249 = vrot.lane.b32.xlu0 %v224, 17
    %v250 = vpop.permute.xlu0 %249
    %251 = vrot.lane.b32.xlu0 %v228, 17
    %v252 = vpop.permute.xlu0 %251
    %253 = vrot.lane.b32.xlu0 %v232, 17
    %v254 = vpop.permute.xlu0 %253
    %255 = vrot.lane.b32.xlu0 %v221, 17
    %v256 = vpop.permute.xlu0 %255
    %257 = vrot.lane.b32.xlu0 %v225, 17
    %v258 = vpop.permute.xlu0 %257
    %259 = vrot.lane.b32.xlu0 %v229, 17
    %v260 = vpop.permute.xlu0 %259
    %261 = vrot.lane.b32.xlu0 %v233, 17
    %v262 = vpop.permute.xlu0 %261
    %263 = vrot.lane.b32.xlu0 %v222, 17
    %v264 = vpop.permute.xlu0 %263
    %265 = vrot.lane.b32.xlu0 %v226, 17
    %v266 = vpop.permute.xlu0 %265
    %267 = vrot.lane.b32.xlu0 %v230, 17
    %v268 = vpop.permute.xlu0 %267
    %269 = vrot.lane.b32.xlu0 %v234, 17
    %v270 = vpop.permute.xlu0 %269
    %v271 = vlaneseq
    %v272 = vand.u32 %v271, 127
    %vm273 = vcmp.lt.s32.totalorder %v272, 17
    %v274 = vsel %vm273, %v256, %v264
    %v275 = vsel %vm273, %v258, %v266
    %v276 = vsel %vm273, %v260, %v268
    %v277 = vsel %vm273, %v262, %v270
    %v278 = vsel %vm273, %v248, %v256
    %v279 = vsel %vm273, %v250, %v258
    %v280 = vsel %vm273, %v252, %v260
    %v281 = vsel %vm273, %v254, %v262
    %v282 = vsel %vm273, %v240, %v248
    %v283 = vsel %vm273, %v242, %v250
    %v284 = vsel %vm273, %v244, %v252
    %v285 = vsel %vm273, %v246, %v254
    %v286 = vsel %vm273, %v264, %v240
    %v287 = vsel %vm273, %v266, %v242
    %v288 = vsel %vm273, %v268, %v244
    %v289 = vsel %vm273, %v270, %v246
    %v290 = vld [vmem:[%s5] ss:$8 sm:$0xf]
    %v292 = vlaneseq
    %v293 = vshrl.u32 %v292, 7
    %v294 = vsub.s32 0, %v293
    %v295 = vrot.slane %v290, %v294
    %v296 = vlaneseq
    %v297 = vshrl.u32 %v296, 7
    %v298 = vsub.s32 1, %v297
    %v299 = vrot.slane %v290, %v298
    %v300 = vlaneseq
    %v301 = vshrl.u32 %v300, 7
    %v302 = vsub.s32 2, %v301
    %v303 = vrot.slane %v290, %v302
    %v304 = vlaneseq
    %v305 = vshrl.u32 %v304, 7
    %v306 = vsub.s32 3, %v305
    %v307 = vrot.slane %v290, %v306
    %v312 = vmul.f32 %v286, %v295
    %v313 = vmul.f32 %v282, %v299
    %v314 = vmul.f32 %v278, %v303
    %v315 = vmul.f32 %v274, %v307
    %v316 = vmul.f32 %v287, %v295
    %v317 = vmul.f32 %v283, %v299
    %v318 = vmul.f32 %v279, %v303
    %v319 = vmul.f32 %v275, %v307
    %v320 = vmul.f32 %v288, %v295
    %v321 = vmul.f32 %v284, %v299
    %v322 = vmul.f32 %v280, %v303
    %v323 = vmul.f32 %v276, %v307
    %v324 = vmul.f32 %v289, %v295
    %v325 = vmul.f32 %v285, %v299
    %v326 = vmul.f32 %v281, %v303
    %v327 = vmul.f32 %v277, %v307
    %329 = vset.pattern.permute.xlu0 0
    %330 = vperm.xlu0 %329, %v235
    %v331 = vpop.permute.xlu0 %330
    %334 = vset.pattern.permute.xlu0 0
    %335 = vperm.xlu0 %334, %v236
    %v336 = vpop.permute.xlu0 %335
    %339 = vset.pattern.permute.xlu0 0
    %340 = vperm.xlu0 %339, %v237
    %v341 = vpop.permute.xlu0 %340
    %344 = vset.pattern.permute.xlu0 0
    %345 = vperm.xlu0 %344, %v238
    %v346 = vpop.permute.xlu0 %345
    %v348 = vmul.f32 %v312, %v331
    %v349 = vmul.f32 %v313, %v331
    %v350 = vmul.f32 %v314, %v331
    %v351 = vmul.f32 %v315, %v331
    %v352 = vmul.f32 %v316, %v336
    %v353 = vmul.f32 %v317, %v336
    %v354 = vmul.f32 %v318, %v336
    %v355 = vmul.f32 %v319, %v336
    %v356 = vmul.f32 %v320, %v341
    %v357 = vmul.f32 %v321, %v341
    %v358 = vmul.f32 %v322, %v341
    %v359 = vmul.f32 %v323, %v341
    %v360 = vmul.f32 %v324, %v346
    %v361 = vmul.f32 %v325, %v346
    %v362 = vmul.f32 %v326, %v346
    %v363 = vmul.f32 %v327, %v346
    %364 = vrot.lane.b32.xlu0 %v219, 16
    %v365 = vpop.permute.xlu0 %364
    %366 = vrot.lane.b32.xlu0 %v223, 16
    %v367 = vpop.permute.xlu0 %366
    %368 = vrot.lane.b32.xlu0 %v227, 16
    %v369 = vpop.permute.xlu0 %368
    %370 = vrot.lane.b32.xlu0 %v231, 16
    %v371 = vpop.permute.xlu0 %370
    %372 = vrot.lane.b32.xlu0 %v220, 16
    %v373 = vpop.permute.xlu0 %372
    %374 = vrot.lane.b32.xlu0 %v224, 16
    %v375 = vpop.permute.xlu0 %374
    %376 = vrot.lane.b32.xlu0 %v228, 16
    %v377 = vpop.permute.xlu0 %376
    %378 = vrot.lane.b32.xlu0 %v232, 16
    %v379 = vpop.permute.xlu0 %378
    %380 = vrot.lane.b32.xlu0 %v221, 16
    %v381 = vpop.permute.xlu0 %380
    %382 = vrot.lane.b32.xlu0 %v225, 16
    %v383 = vpop.permute.xlu0 %382
    %384 = vrot.lane.b32.xlu0 %v229, 16
    %v385 = vpop.permute.xlu0 %384
    %386 = vrot.lane.b32.xlu0 %v233, 16
    %v387 = vpop.permute.xlu0 %386
    %388 = vrot.lane.b32.xlu0 %v222, 16
    %v389 = vpop.permute.xlu0 %388
    %390 = vrot.lane.b32.xlu0 %v226, 16
    %v391 = vpop.permute.xlu0 %390
    %392 = vrot.lane.b32.xlu0 %v230, 16
    %v393 = vpop.permute.xlu0 %392
    %394 = vrot.lane.b32.xlu0 %v234, 16
    %v395 = vpop.permute.xlu0 %394
    %vm396 = vcmp.lt.s32.totalorder %v272, 16
    %v397 = vsel %vm396, %v381, %v389
    %v398 = vsel %vm396, %v383, %v391
    %v399 = vsel %vm396, %v385, %v393
    %v400 = vsel %vm396, %v387, %v395
    %v401 = vsel %vm396, %v373, %v381
    %v402 = vsel %vm396, %v375, %v383
    %v403 = vsel %vm396, %v377, %v385
    %v404 = vsel %vm396, %v379, %v387
    %v405 = vsel %vm396, %v365, %v373
    %v406 = vsel %vm396, %v367, %v375
    %v407 = vsel %vm396, %v369, %v377
    %v408 = vsel %vm396, %v371, %v379
    %v409 = vsel %vm396, %v389, %v365
    %v410 = vsel %vm396, %v391, %v367
    %v411 = vsel %vm396, %v393, %v369
    %v412 = vsel %vm396, %v395, %v371
    %s413 = scalar_lea.vmem %s5, 1
    %v414 = vld [vmem:[%s413] ss:$8 sm:$0xf]
    %v416 = vlaneseq
    %v417 = vshrl.u32 %v416, 7
    %v418 = vsub.s32 0, %v417
    %v419 = vrot.slane %v414, %v418
    %v420 = vlaneseq
    %v421 = vshrl.u32 %v420, 7
    %v422 = vsub.s32 1, %v421
    %v423 = vrot.slane %v414, %v422
    %v424 = vlaneseq
    %v425 = vshrl.u32 %v424, 7
    %v426 = vsub.s32 2, %v425
    %v427 = vrot.slane %v414, %v426
    %v428 = vlaneseq
    %v429 = vshrl.u32 %v428, 7
    %v430 = vsub.s32 3, %v429
    %v431 = vrot.slane %v414, %v430
    %v436 = vmul.f32 %v409, %v419
    %v437 = vmul.f32 %v405, %v423
    %v438 = vmul.f32 %v401, %v427
    %v439 = vmul.f32 %v397, %v431
    %v440 = vmul.f32 %v410, %v419
    %v441 = vmul.f32 %v406, %v423
    %v442 = vmul.f32 %v402, %v427
    %v443 = vmul.f32 %v398, %v431
    %v444 = vmul.f32 %v411, %v419
    %v445 = vmul.f32 %v407, %v423
    %v446 = vmul.f32 %v403, %v427
    %v447 = vmul.f32 %v399, %v431
    %v448 = vmul.f32 %v412, %v419
    %v449 = vmul.f32 %v408, %v423
    %v450 = vmul.f32 %v404, %v427
    %v451 = vmul.f32 %v400, %v431
    %452 = vset.pattern.permute.xlu0 1
    %453 = vperm.xlu0 %452, %v235
    %v454 = vpop.permute.xlu0 %453
    %456 = vset.pattern.permute.xlu0 1
    %457 = vperm.xlu0 %456, %v236
    %v458 = vpop.permute.xlu0 %457
    %460 = vset.pattern.permute.xlu0 1
    %461 = vperm.xlu0 %460, %v237
    %v462 = vpop.permute.xlu0 %461
    %464 = vset.pattern.permute.xlu0 1
    %465 = vperm.xlu0 %464, %v238
    %v466 = vpop.permute.xlu0 %465
    %v468 = vmul.f32 %v436, %v454
    %v469 = vmul.f32 %v437, %v454
    %v470 = vmul.f32 %v438, %v454
    %v471 = vmul.f32 %v439, %v454
    %v472 = vmul.f32 %v440, %v458
    %v473 = vmul.f32 %v441, %v458
    %v474 = vmul.f32 %v442, %v458
    %v475 = vmul.f32 %v443, %v458
    %v476 = vmul.f32 %v444, %v462
    %v477 = vmul.f32 %v445, %v462
    %v478 = vmul.f32 %v446, %v462
    %v479 = vmul.f32 %v447, %v462
    %v480 = vmul.f32 %v448, %v466
    %v481 = vmul.f32 %v449, %v466
    %v482 = vmul.f32 %v450, %v466
    %v483 = vmul.f32 %v451, %v466
    %v484 = vadd.f32 %v348, %v468
    %v485 = vadd.f32 %v349, %v469
    %v486 = vadd.f32 %v350, %v470
    %v487 = vadd.f32 %v351, %v471
    %v488 = vadd.f32 %v352, %v472
    %v489 = vadd.f32 %v353, %v473
    %v490 = vadd.f32 %v354, %v474
    %v491 = vadd.f32 %v355, %v475
    %v492 = vadd.f32 %v356, %v476
    %v493 = vadd.f32 %v357, %v477
    %v494 = vadd.f32 %v358, %v478
    %v495 = vadd.f32 %v359, %v479
    %v496 = vadd.f32 %v360, %v480
    %v497 = vadd.f32 %v361, %v481
    %v498 = vadd.f32 %v362, %v482
    %v499 = vadd.f32 %v363, %v483
    %500 = vrot.lane.b32.xlu0 %v219, 15
    %v501 = vpop.permute.xlu0 %500
    %502 = vrot.lane.b32.xlu0 %v223, 15
    %v503 = vpop.permute.xlu0 %502
    %504 = vrot.lane.b32.xlu0 %v227, 15
    %v505 = vpop.permute.xlu0 %504
    %506 = vrot.lane.b32.xlu0 %v231, 15
    %v507 = vpop.permute.xlu0 %506
    %508 = vrot.lane.b32.xlu0 %v220, 15
    %v509 = vpop.permute.xlu0 %508
    %510 = vrot.lane.b32.xlu0 %v224, 15
    %v511 = vpop.permute.xlu0 %510
    %512 = vrot.lane.b32.xlu0 %v228, 15
    %v513 = vpop.permute.xlu0 %512
    %514 = vrot.lane.b32.xlu0 %v232, 15
    %v515 = vpop.permute.xlu0 %514
    %516 = vrot.lane.b32.xlu0 %v221, 15
    %v517 = vpop.permute.xlu0 %516
    %518 = vrot.lane.b32.xlu0 %v225, 15
    %v519 = vpop.permute.xlu0 %518
    %520 = vrot.lane.b32.xlu0 %v229, 15
    %v521 = vpop.permute.xlu0 %520
    %522 = vrot.lane.b32.xlu0 %v233, 15
    %v523 = vpop.permute.xlu0 %522
    %524 = vrot.lane.b32.xlu0 %v222, 15
    %v525 = vpop.permute.xlu0 %524
    %526 = vrot.lane.b32.xlu0 %v226, 15
    %v527 = vpop.permute.xlu0 %526
    %528 = vrot.lane.b32.xlu0 %v230, 15
    %v529 = vpop.permute.xlu0 %528
    %530 = vrot.lane.b32.xlu0 %v234, 15
    %v531 = vpop.permute.xlu0 %530
    %vm532 = vcmp.lt.s32.totalorder %v272, 15
    %v533 = vsel %vm532, %v517, %v525
    %v534 = vsel %vm532, %v519, %v527
    %v535 = vsel %vm532, %v521, %v529
    %v536 = vsel %vm532, %v523, %v531
    %v537 = vsel %vm532, %v509, %v517
    %v538 = vsel %vm532, %v511, %v519
    %v539 = vsel %vm532, %v513, %v521
    %v540 = vsel %vm532, %v515, %v523
    %v541 = vsel %vm532, %v501, %v509
    %v542 = vsel %vm532, %v503, %v511
    %v543 = vsel %vm532, %v505, %v513
    %v544 = vsel %vm532, %v507, %v515
    %v545 = vsel %vm532, %v525, %v501
    %v546 = vsel %vm532, %v527, %v503
    %v547 = vsel %vm532, %v529, %v505
    %v548 = vsel %vm532, %v531, %v507
    %s549 = scalar_lea.vmem %s5, 2
    %v550 = vld [vmem:[%s549] ss:$8 sm:$0xf]
    %v552 = vlaneseq
    %v553 = vshrl.u32 %v552, 7
    %v554 = vsub.s32 0, %v553
    %v555 = vrot.slane %v550, %v554
    %v556 = vlaneseq
    %v557 = vshrl.u32 %v556, 7
    %v558 = vsub.s32 1, %v557
    %v559 = vrot.slane %v550, %v558
    %v560 = vlaneseq
    %v561 = vshrl.u32 %v560, 7
    %v562 = vsub.s32 2, %v561
    %v563 = vrot.slane %v550, %v562
    %v564 = vlaneseq
    %v565 = vshrl.u32 %v564, 7
    %v566 = vsub.s32 3, %v565
    %v567 = vrot.slane %v550, %v566
    %v572 = vmul.f32 %v545, %v555
    %v573 = vmul.f32 %v541, %v559
    %v574 = vmul.f32 %v537, %v563
    %v575 = vmul.f32 %v533, %v567
    %v576 = vmul.f32 %v546, %v555
    %v577 = vmul.f32 %v542, %v559
    %v578 = vmul.f32 %v538, %v563
    %v579 = vmul.f32 %v534, %v567
    %v580 = vmul.f32 %v547, %v555
    %v581 = vmul.f32 %v543, %v559
    %v582 = vmul.f32 %v539, %v563
    %v583 = vmul.f32 %v535, %v567
    %v584 = vmul.f32 %v548, %v555
    %v585 = vmul.f32 %v544, %v559
    %v586 = vmul.f32 %v540, %v563
    %v587 = vmul.f32 %v536, %v567
    %588 = vset.pattern.permute.xlu0 2
    %589 = vperm.xlu0 %588, %v235
    %v590 = vpop.permute.xlu0 %589
    %592 = vset.pattern.permute.xlu0 2
    %593 = vperm.xlu0 %592, %v236
    %v594 = vpop.permute.xlu0 %593
    %596 = vset.pattern.permute.xlu0 2
    %597 = vperm.xlu0 %596, %v237
    %v598 = vpop.permute.xlu0 %597
    %600 = vset.pattern.permute.xlu0 2
    %601 = vperm.xlu0 %600, %v238
    %v602 = vpop.permute.xlu0 %601
    %v604 = vmul.f32 %v572, %v590
    %v605 = vmul.f32 %v573, %v590
    %v606 = vmul.f32 %v574, %v590
    %v607 = vmul.f32 %v575, %v590
    %v608 = vmul.f32 %v576, %v594
    %v609 = vmul.f32 %v577, %v594
    %v610 = vmul.f32 %v578, %v594
    %v611 = vmul.f32 %v579, %v594
    %v612 = vmul.f32 %v580, %v598
    %v613 = vmul.f32 %v581, %v598
    %v614 = vmul.f32 %v582, %v598
    %v615 = vmul.f32 %v583, %v598
    %v616 = vmul.f32 %v584, %v602
    %v617 = vmul.f32 %v585, %v602
    %v618 = vmul.f32 %v586, %v602
    %v619 = vmul.f32 %v587, %v602
    %v620 = vadd.f32 %v484, %v604
    %v621 = vadd.f32 %v485, %v605
    %v622 = vadd.f32 %v486, %v606
    %v623 = vadd.f32 %v487, %v607
    %v624 = vadd.f32 %v488, %v608
    %v625 = vadd.f32 %v489, %v609
    %v626 = vadd.f32 %v490, %v610
    %v627 = vadd.f32 %v491, %v611
    %v628 = vadd.f32 %v492, %v612
    %v629 = vadd.f32 %v493, %v613
    %v630 = vadd.f32 %v494, %v614
    %v631 = vadd.f32 %v495, %v615
    %v632 = vadd.f32 %v496, %v616
    %v633 = vadd.f32 %v497, %v617
    %v634 = vadd.f32 %v498, %v618
    %v635 = vadd.f32 %v499, %v619
    %636 = vrot.lane.b32.xlu0 %v219, 1
    %v637 = vpop.permute.xlu0 %636
    %638 = vrot.lane.b32.xlu0 %v223, 1
    %v639 = vpop.permute.xlu0 %638
    %640 = vrot.lane.b32.xlu0 %v227, 1
    %v641 = vpop.permute.xlu0 %640
    %642 = vrot.lane.b32.xlu0 %v231, 1
    %v643 = vpop.permute.xlu0 %642
    %644 = vrot.lane.b32.xlu0 %v220, 1
    %v645 = vpop.permute.xlu0 %644
    %646 = vrot.lane.b32.xlu0 %v224, 1
    %v647 = vpop.permute.xlu0 %646
    %648 = vrot.lane.b32.xlu0 %v228, 1
    %v649 = vpop.permute.xlu0 %648
    %650 = vrot.lane.b32.xlu0 %v232, 1
    %v651 = vpop.permute.xlu0 %650
    %652 = vrot.lane.b32.xlu0 %v221, 1
    %v653 = vpop.permute.xlu0 %652
    %654 = vrot.lane.b32.xlu0 %v225, 1
    %v655 = vpop.permute.xlu0 %654
    %656 = vrot.lane.b32.xlu0 %v229, 1
    %v657 = vpop.permute.xlu0 %656
    %658 = vrot.lane.b32.xlu0 %v233, 1
    %v659 = vpop.permute.xlu0 %658
    %660 = vrot.lane.b32.xlu0 %v222, 1
    %v661 = vpop.permute.xlu0 %660
    %662 = vrot.lane.b32.xlu0 %v226, 1
    %v663 = vpop.permute.xlu0 %662
    %664 = vrot.lane.b32.xlu0 %v230, 1
    %v665 = vpop.permute.xlu0 %664
    %666 = vrot.lane.b32.xlu0 %v234, 1
    %v667 = vpop.permute.xlu0 %666
    %vm668 = vcmp.lt.s32.totalorder %v272, 1
    %v669 = vsel %vm668, %v653, %v661
    %v670 = vsel %vm668, %v655, %v663
    %v671 = vsel %vm668, %v657, %v665
    %v672 = vsel %vm668, %v659, %v667
    %v673 = vsel %vm668, %v645, %v653
    %v674 = vsel %vm668, %v647, %v655
    %v675 = vsel %vm668, %v649, %v657
    %v676 = vsel %vm668, %v651, %v659
    %v677 = vsel %vm668, %v637, %v645
    %v678 = vsel %vm668, %v639, %v647
    %v679 = vsel %vm668, %v641, %v649
    %v680 = vsel %vm668, %v643, %v651
    %v681 = vsel %vm668, %v661, %v637
    %v682 = vsel %vm668, %v663, %v639
    %v683 = vsel %vm668, %v665, %v641
    %v684 = vsel %vm668, %v667, %v643
    %s685 = scalar_lea.vmem %s5, 3
    %v686 = vld [vmem:[%s685] ss:$8 sm:$0xf]
    %v688 = vlaneseq
    %v689 = vshrl.u32 %v688, 7
    %v690 = vsub.s32 0, %v689
    %v691 = vrot.slane %v686, %v690
    %v692 = vlaneseq
    %v693 = vshrl.u32 %v692, 7
    %v694 = vsub.s32 1, %v693
    %v695 = vrot.slane %v686, %v694
    %v696 = vlaneseq
    %v697 = vshrl.u32 %v696, 7
    %v698 = vsub.s32 2, %v697
    %v699 = vrot.slane %v686, %v698
    %v700 = vlaneseq
    %v701 = vshrl.u32 %v700, 7
    %v702 = vsub.s32 3, %v701
    %v703 = vrot.slane %v686, %v702
    %v708 = vmul.f32 %v681, %v691
    %v709 = vmul.f32 %v677, %v695
    %v710 = vmul.f32 %v673, %v699
    %v711 = vmul.f32 %v669, %v703
    %v712 = vmul.f32 %v682, %v691
    %v713 = vmul.f32 %v678, %v695
    %v714 = vmul.f32 %v674, %v699
    %v715 = vmul.f32 %v670, %v703
    %v716 = vmul.f32 %v683, %v691
    %v717 = vmul.f32 %v679, %v695
    %v718 = vmul.f32 %v675, %v699
    %v719 = vmul.f32 %v671, %v703
    %v720 = vmul.f32 %v684, %v691
    %v721 = vmul.f32 %v680, %v695
    %v722 = vmul.f32 %v676, %v699
    %v723 = vmul.f32 %v672, %v703
    %724 = vset.pattern.permute.xlu0 3
    %725 = vperm.xlu0 %724, %v235
    %v726 = vpop.permute.xlu0 %725
    %728 = vset.pattern.permute.xlu0 3
    %729 = vperm.xlu0 %728, %v236
    %v730 = vpop.permute.xlu0 %729
    %732 = vset.pattern.permute.xlu0 3
    %733 = vperm.xlu0 %732, %v237
    %v734 = vpop.permute.xlu0 %733
    %736 = vset.pattern.permute.xlu0 3
    %737 = vperm.xlu0 %736, %v238
    %v738 = vpop.permute.xlu0 %737
    %v740 = vmul.f32 %v708, %v726
    %v741 = vmul.f32 %v709, %v726
    %v742 = vmul.f32 %v710, %v726
    %v743 = vmul.f32 %v711, %v726
    %v744 = vmul.f32 %v712, %v730
    %v745 = vmul.f32 %v713, %v730
    %v746 = vmul.f32 %v714, %v730
    %v747 = vmul.f32 %v715, %v730
    %v748 = vmul.f32 %v716, %v734
    %v749 = vmul.f32 %v717, %v734
    %v750 = vmul.f32 %v718, %v734
    %v751 = vmul.f32 %v719, %v734
    %v752 = vmul.f32 %v720, %v738
    %v753 = vmul.f32 %v721, %v738
    %v754 = vmul.f32 %v722, %v738
    %v755 = vmul.f32 %v723, %v738
    %v756 = vadd.f32 %v620, %v740
    %v757 = vadd.f32 %v621, %v741
    %v758 = vadd.f32 %v622, %v742
    %v759 = vadd.f32 %v623, %v743
    %v760 = vadd.f32 %v624, %v744
    %v761 = vadd.f32 %v625, %v745
    %v762 = vadd.f32 %v626, %v746
    %v763 = vadd.f32 %v627, %v747
    %v764 = vadd.f32 %v628, %v748
    %v765 = vadd.f32 %v629, %v749
    %v766 = vadd.f32 %v630, %v750
    %v767 = vadd.f32 %v631, %v751
    %v768 = vadd.f32 %v632, %v752
    %v769 = vadd.f32 %v633, %v753
    %v770 = vadd.f32 %v634, %v754
    %v771 = vadd.f32 %v635, %v755
    %772 = vset.pattern.permute.xlu0 4
    %773 = vperm.xlu0 %772, %v235
    %v774 = vpop.permute.xlu0 %773
    %776 = vset.pattern.permute.xlu0 4
    %777 = vperm.xlu0 %776, %v236
    %v778 = vpop.permute.xlu0 %777
    %780 = vset.pattern.permute.xlu0 4
    %781 = vperm.xlu0 %780, %v237
    %v782 = vpop.permute.xlu0 %781
    %784 = vset.pattern.permute.xlu0 4
    %785 = vperm.xlu0 %784, %v238
    %v786 = vpop.permute.xlu0 %785
    %v788 = vmul.f32 %v219, %v774
    %v789 = vmul.f32 %v220, %v774
    %v790 = vmul.f32 %v221, %v774
    %v791 = vmul.f32 %v222, %v774
    %v792 = vmul.f32 %v223, %v778
    %v793 = vmul.f32 %v224, %v778
    %v794 = vmul.f32 %v225, %v778
    %v795 = vmul.f32 %v226, %v778
    %v796 = vmul.f32 %v227, %v782
    %v797 = vmul.f32 %v228, %v782
    %v798 = vmul.f32 %v229, %v782
    %v799 = vmul.f32 %v230, %v782
    %v800 = vmul.f32 %v231, %v786
    %v801 = vmul.f32 %v232, %v786
    %v802 = vmul.f32 %v233, %v786
    %v803 = vmul.f32 %v234, %v786
    %v804 = vadd.f32 %v756, %v788
    %v805 = vadd.f32 %v757, %v789
    %v806 = vadd.f32 %v758, %v790
    %v807 = vadd.f32 %v759, %v791
    %v808 = vadd.f32 %v760, %v792
    %v809 = vadd.f32 %v761, %v793
    %v810 = vadd.f32 %v762, %v794
    %v811 = vadd.f32 %v763, %v795
    %v812 = vadd.f32 %v764, %v796
    %v813 = vadd.f32 %v765, %v797
    %v814 = vadd.f32 %v766, %v798
    %v815 = vadd.f32 %v767, %v799
    %v816 = vadd.f32 %v768, %v800
    %v817 = vadd.f32 %v769, %v801
    %v818 = vadd.f32 %v770, %v802
    %v819 = vadd.f32 %v771, %v803
    %820 = vrot.lane.b32.xlu0 %v219, 127
    %v821 = vpop.permute.xlu0 %820
    %822 = vrot.lane.b32.xlu0 %v223, 127
    %v823 = vpop.permute.xlu0 %822
    %824 = vrot.lane.b32.xlu0 %v227, 127
    %v825 = vpop.permute.xlu0 %824
    %826 = vrot.lane.b32.xlu0 %v231, 127
    %v827 = vpop.permute.xlu0 %826
    %828 = vrot.lane.b32.xlu0 %v220, 127
    %v829 = vpop.permute.xlu0 %828
    %830 = vrot.lane.b32.xlu0 %v224, 127
    %v831 = vpop.permute.xlu0 %830
    %832 = vrot.lane.b32.xlu0 %v228, 127
    %v833 = vpop.permute.xlu0 %832
    %834 = vrot.lane.b32.xlu0 %v232, 127
    %v835 = vpop.permute.xlu0 %834
    %836 = vrot.lane.b32.xlu0 %v221, 127
    %v837 = vpop.permute.xlu0 %836
    %838 = vrot.lane.b32.xlu0 %v225, 127
    %v839 = vpop.permute.xlu0 %838
    %840 = vrot.lane.b32.xlu0 %v229, 127
    %v841 = vpop.permute.xlu0 %840
    %842 = vrot.lane.b32.xlu0 %v233, 127
    %v843 = vpop.permute.xlu0 %842
    %844 = vrot.lane.b32.xlu0 %v222, 127
    %v845 = vpop.permute.xlu0 %844
    %846 = vrot.lane.b32.xlu0 %v226, 127
    %v847 = vpop.permute.xlu0 %846
    %848 = vrot.lane.b32.xlu0 %v230, 127
    %v849 = vpop.permute.xlu0 %848
    %850 = vrot.lane.b32.xlu0 %v234, 127
    %v851 = vpop.permute.xlu0 %850
    %vm852 = vcmp.lt.s32.totalorder %v272, 127
    %v853 = vsel %vm852, %v837, %v845
    %v854 = vsel %vm852, %v839, %v847
    %v855 = vsel %vm852, %v841, %v849
    %v856 = vsel %vm852, %v843, %v851
    %v857 = vsel %vm852, %v829, %v837
    %v858 = vsel %vm852, %v831, %v839
    %v859 = vsel %vm852, %v833, %v841
    %v860 = vsel %vm852, %v835, %v843
    %v861 = vsel %vm852, %v821, %v829
    %v862 = vsel %vm852, %v823, %v831
    %v863 = vsel %vm852, %v825, %v833
    %v864 = vsel %vm852, %v827, %v835
    %v865 = vsel %vm852, %v845, %v821
    %v866 = vsel %vm852, %v847, %v823
    %v867 = vsel %vm852, %v849, %v825
    %v868 = vsel %vm852, %v851, %v827
    %s869 = scalar_lea.vmem %s5, 5
    %v870 = vld [vmem:[%s869] ss:$8 sm:$0xf]
    %v872 = vlaneseq
    %v873 = vshrl.u32 %v872, 7
    %v874 = vsub.s32 0, %v873
    %v875 = vrot.slane %v870, %v874
    %v876 = vlaneseq
    %v877 = vshrl.u32 %v876, 7
    %v878 = vsub.s32 1, %v877
    %v879 = vrot.slane %v870, %v878
    %v880 = vlaneseq
    %v881 = vshrl.u32 %v880, 7
    %v882 = vsub.s32 2, %v881
    %v883 = vrot.slane %v870, %v882
    %v884 = vlaneseq
    %v885 = vshrl.u32 %v884, 7
    %v886 = vsub.s32 3, %v885
    %v887 = vrot.slane %v870, %v886
    %v892 = vmul.f32 %v861, %v875
    %v893 = vmul.f32 %v857, %v879
    %v894 = vmul.f32 %v853, %v883
    %v895 = vmul.f32 %v865, %v887
    %v896 = vmul.f32 %v862, %v875
    %v897 = vmul.f32 %v858, %v879
    %v898 = vmul.f32 %v854, %v883
    %v899 = vmul.f32 %v866, %v887
    %v900 = vmul.f32 %v863, %v875
    %v901 = vmul.f32 %v859, %v879
    %v902 = vmul.f32 %v855, %v883
    %v903 = vmul.f32 %v867, %v887
    %v904 = vmul.f32 %v864, %v875
    %v905 = vmul.f32 %v860, %v879
    %v906 = vmul.f32 %v856, %v883
    %v907 = vmul.f32 %v868, %v887
    %908 = vset.pattern.permute.xlu0 5
    %909 = vperm.xlu0 %908, %v235
    %v910 = vpop.permute.xlu0 %909
    %912 = vset.pattern.permute.xlu0 5
    %913 = vperm.xlu0 %912, %v236
    %v914 = vpop.permute.xlu0 %913
    %916 = vset.pattern.permute.xlu0 5
    %917 = vperm.xlu0 %916, %v237
    %v918 = vpop.permute.xlu0 %917
    %920 = vset.pattern.permute.xlu0 5
    %921 = vperm.xlu0 %920, %v238
    %v922 = vpop.permute.xlu0 %921
    %v924 = vmul.f32 %v892, %v910
    %v925 = vmul.f32 %v893, %v910
    %v926 = vmul.f32 %v894, %v910
    %v927 = vmul.f32 %v895, %v910
    %v928 = vmul.f32 %v896, %v914
    %v929 = vmul.f32 %v897, %v914
    %v930 = vmul.f32 %v898, %v914
    %v931 = vmul.f32 %v899, %v914
    %v932 = vmul.f32 %v900, %v918
    %v933 = vmul.f32 %v901, %v918
    %v934 = vmul.f32 %v902, %v918
    %v935 = vmul.f32 %v903, %v918
    %v936 = vmul.f32 %v904, %v922
    %v937 = vmul.f32 %v905, %v922
    %v938 = vmul.f32 %v906, %v922
    %v939 = vmul.f32 %v907, %v922
    %v940 = vadd.f32 %v804, %v924
    %v941 = vadd.f32 %v805, %v925
    %v942 = vadd.f32 %v806, %v926
    %v943 = vadd.f32 %v807, %v927
    %v944 = vadd.f32 %v808, %v928
    %v945 = vadd.f32 %v809, %v929
    %v946 = vadd.f32 %v810, %v930
    %v947 = vadd.f32 %v811, %v931
    %v948 = vadd.f32 %v812, %v932
    %v949 = vadd.f32 %v813, %v933
    %v950 = vadd.f32 %v814, %v934
    %v951 = vadd.f32 %v815, %v935
    %v952 = vadd.f32 %v816, %v936
    %v953 = vadd.f32 %v817, %v937
    %v954 = vadd.f32 %v818, %v938
    %v955 = vadd.f32 %v819, %v939
    %956 = vrot.lane.b32.xlu0 %v219, 113
    %v957 = vpop.permute.xlu0 %956
    %958 = vrot.lane.b32.xlu0 %v223, 113
    %v959 = vpop.permute.xlu0 %958
    %960 = vrot.lane.b32.xlu0 %v227, 113
    %v961 = vpop.permute.xlu0 %960
    %962 = vrot.lane.b32.xlu0 %v231, 113
    %v963 = vpop.permute.xlu0 %962
    %964 = vrot.lane.b32.xlu0 %v220, 113
    %v965 = vpop.permute.xlu0 %964
    %966 = vrot.lane.b32.xlu0 %v224, 113
    %v967 = vpop.permute.xlu0 %966
    %968 = vrot.lane.b32.xlu0 %v228, 113
    %v969 = vpop.permute.xlu0 %968
    %970 = vrot.lane.b32.xlu0 %v232, 113
    %v971 = vpop.permute.xlu0 %970
    %972 = vrot.lane.b32.xlu0 %v221, 113
    %v973 = vpop.permute.xlu0 %972
    %974 = vrot.lane.b32.xlu0 %v225, 113
    %v975 = vpop.permute.xlu0 %974
    %976 = vrot.lane.b32.xlu0 %v229, 113
    %v977 = vpop.permute.xlu0 %976
    %978 = vrot.lane.b32.xlu0 %v233, 113
    %v979 = vpop.permute.xlu0 %978
    %980 = vrot.lane.b32.xlu0 %v222, 113
    %v981 = vpop.permute.xlu0 %980
    %982 = vrot.lane.b32.xlu0 %v226, 113
    %v983 = vpop.permute.xlu0 %982
    %984 = vrot.lane.b32.xlu0 %v230, 113
    %v985 = vpop.permute.xlu0 %984
    %986 = vrot.lane.b32.xlu0 %v234, 113
    %v987 = vpop.permute.xlu0 %986
    %vm988 = vcmp.lt.s32.totalorder %v272, 113
    %v989 = vsel %vm988, %v973, %v981
    %v990 = vsel %vm988, %v975, %v983
    %v991 = vsel %vm988, %v977, %v985
    %v992 = vsel %vm988, %v979, %v987
    %v993 = vsel %vm988, %v965, %v973
    %v994 = vsel %vm988, %v967, %v975
    %v995 = vsel %vm988, %v969, %v977
    %v996 = vsel %vm988, %v971, %v979
    %v997 = vsel %vm988, %v957, %v965
    %v998 = vsel %vm988, %v959, %v967
    %v999 = vsel %vm988, %v961, %v969
    %v1000 = vsel %vm988, %v963, %v971
    %v1001 = vsel %vm988, %v981, %v957
    %v1002 = vsel %vm988, %v983, %v959
    %v1003 = vsel %vm988, %v985, %v961
    %v1004 = vsel %vm988, %v987, %v963
    %s1005 = scalar_lea.vmem %s5, 6
    %v1006 = vld [vmem:[%s1005] ss:$8 sm:$0xf]
    %v1008 = vlaneseq
    %v1009 = vshrl.u32 %v1008, 7
    %v1010 = vsub.s32 0, %v1009
    %v1011 = vrot.slane %v1006, %v1010
    %v1012 = vlaneseq
    %v1013 = vshrl.u32 %v1012, 7
    %v1014 = vsub.s32 1, %v1013
    %v1015 = vrot.slane %v1006, %v1014
    %v1016 = vlaneseq
    %v1017 = vshrl.u32 %v1016, 7
    %v1018 = vsub.s32 2, %v1017
    %v1019 = vrot.slane %v1006, %v1018
    %v1020 = vlaneseq
    %v1021 = vshrl.u32 %v1020, 7
    %v1022 = vsub.s32 3, %v1021
    %v1023 = vrot.slane %v1006, %v1022
    %v1028 = vmul.f32 %v997, %v1011
    %v1029 = vmul.f32 %v993, %v1015
    %v1030 = vmul.f32 %v989, %v1019
    %v1031 = vmul.f32 %v1001, %v1023
    %v1032 = vmul.f32 %v998, %v1011
    %v1033 = vmul.f32 %v994, %v1015
    %v1034 = vmul.f32 %v990, %v1019
    %v1035 = vmul.f32 %v1002, %v1023
    %v1036 = vmul.f32 %v999, %v1011
    %v1037 = vmul.f32 %v995, %v1015
    %v1038 = vmul.f32 %v991, %v1019
    %v1039 = vmul.f32 %v1003, %v1023
    %v1040 = vmul.f32 %v1000, %v1011
    %v1041 = vmul.f32 %v996, %v1015
    %v1042 = vmul.f32 %v992, %v1019
    %v1043 = vmul.f32 %v1004, %v1023
    %1044 = vset.pattern.permute.xlu0 6
    %1045 = vperm.xlu0 %1044, %v235
    %v1046 = vpop.permute.xlu0 %1045
    %1048 = vset.pattern.permute.xlu0 6
    %1049 = vperm.xlu0 %1048, %v236
    %v1050 = vpop.permute.xlu0 %1049
    %1052 = vset.pattern.permute.xlu0 6
    %1053 = vperm.xlu0 %1052, %v237
    %v1054 = vpop.permute.xlu0 %1053
    %1056 = vset.pattern.permute.xlu0 6
    %1057 = vperm.xlu0 %1056, %v238
    %v1058 = vpop.permute.xlu0 %1057
    %v1060 = vmul.f32 %v1028, %v1046
    %v1061 = vmul.f32 %v1029, %v1046
    %v1062 = vmul.f32 %v1030, %v1046
    %v1063 = vmul.f32 %v1031, %v1046
    %v1064 = vmul.f32 %v1032, %v1050
    %v1065 = vmul.f32 %v1033, %v1050
    %v1066 = vmul.f32 %v1034, %v1050
    %v1067 = vmul.f32 %v1035, %v1050
    %v1068 = vmul.f32 %v1036, %v1054
    %v1069 = vmul.f32 %v1037, %v1054
    %v1070 = vmul.f32 %v1038, %v1054
    %v1071 = vmul.f32 %v1039, %v1054
    %v1072 = vmul.f32 %v1040, %v1058
    %v1073 = vmul.f32 %v1041, %v1058
    %v1074 = vmul.f32 %v1042, %v1058
    %v1075 = vmul.f32 %v1043, %v1058
    %v1076 = vadd.f32 %v940, %v1060
    %v1077 = vadd.f32 %v941, %v1061
    %v1078 = vadd.f32 %v942, %v1062
    %v1079 = vadd.f32 %v943, %v1063
    %v1080 = vadd.f32 %v944, %v1064
    %v1081 = vadd.f32 %v945, %v1065
    %v1082 = vadd.f32 %v946, %v1066
    %v1083 = vadd.f32 %v947, %v1067
    %v1084 = vadd.f32 %v948, %v1068
    %v1085 = vadd.f32 %v949, %v1069
    %v1086 = vadd.f32 %v950, %v1070
    %v1087 = vadd.f32 %v951, %v1071
    %v1088 = vadd.f32 %v952, %v1072
    %v1089 = vadd.f32 %v953, %v1073
    %v1090 = vadd.f32 %v954, %v1074
    %v1091 = vadd.f32 %v955, %v1075
    %1092 = vrot.lane.b32.xlu0 %v219, 112
    %v1093 = vpop.permute.xlu0 %1092
    %1094 = vrot.lane.b32.xlu0 %v223, 112
    %v1095 = vpop.permute.xlu0 %1094
    %1096 = vrot.lane.b32.xlu0 %v227, 112
    %v1097 = vpop.permute.xlu0 %1096
    %1098 = vrot.lane.b32.xlu0 %v231, 112
    %v1099 = vpop.permute.xlu0 %1098
    %1100 = vrot.lane.b32.xlu0 %v220, 112
    %v1101 = vpop.permute.xlu0 %1100
    %1102 = vrot.lane.b32.xlu0 %v224, 112
    %v1103 = vpop.permute.xlu0 %1102
    %1104 = vrot.lane.b32.xlu0 %v228, 112
    %v1105 = vpop.permute.xlu0 %1104
    %1106 = vrot.lane.b32.xlu0 %v232, 112
    %v1107 = vpop.permute.xlu0 %1106
    %1108 = vrot.lane.b32.xlu0 %v221, 112
    %v1109 = vpop.permute.xlu0 %1108
    %1110 = vrot.lane.b32.xlu0 %v225, 112
    %v1111 = vpop.permute.xlu0 %1110
    %1112 = vrot.lane.b32.xlu0 %v229, 112
    %v1113 = vpop.permute.xlu0 %1112
    %1114 = vrot.lane.b32.xlu0 %v233, 112
    %v1115 = vpop.permute.xlu0 %1114
    %1116 = vrot.lane.b32.xlu0 %v222, 112
    %v1117 = vpop.permute.xlu0 %1116
    %1118 = vrot.lane.b32.xlu0 %v226, 112
    %v1119 = vpop.permute.xlu0 %1118
    %1120 = vrot.lane.b32.xlu0 %v230, 112
    %v1121 = vpop.permute.xlu0 %1120
    %1122 = vrot.lane.b32.xlu0 %v234, 112
    %v1123 = vpop.permute.xlu0 %1122
    %vm1124 = vcmp.lt.s32.totalorder %v272, 112
    %v1125 = vsel %vm1124, %v1109, %v1117
    %v1126 = vsel %vm1124, %v1111, %v1119
    %v1127 = vsel %vm1124, %v1113, %v1121
    %v1128 = vsel %vm1124, %v1115, %v1123
    %v1129 = vsel %vm1124, %v1101, %v1109
    %v1130 = vsel %vm1124, %v1103, %v1111
    %v1131 = vsel %vm1124, %v1105, %v1113
    %v1132 = vsel %vm1124, %v1107, %v1115
    %v1133 = vsel %vm1124, %v1093, %v1101
    %v1134 = vsel %vm1124, %v1095, %v1103
    %v1135 = vsel %vm1124, %v1097, %v1105
    %v1136 = vsel %vm1124, %v1099, %v1107
    %v1137 = vsel %vm1124, %v1117, %v1093
    %v1138 = vsel %vm1124, %v1119, %v1095
    %v1139 = vsel %vm1124, %v1121, %v1097
    %v1140 = vsel %vm1124, %v1123, %v1099
    %s1141 = scalar_lea.vmem %s5, 7
    %v1142 = vld [vmem:[%s1141] ss:$8 sm:$0xf]
    %v1144 = vlaneseq
    %v1145 = vshrl.u32 %v1144, 7
    %v1146 = vsub.s32 0, %v1145
    %v1147 = vrot.slane %v1142, %v1146
    %v1148 = vlaneseq
    %v1149 = vshrl.u32 %v1148, 7
    %v1150 = vsub.s32 1, %v1149
    %v1151 = vrot.slane %v1142, %v1150
    %v1152 = vlaneseq
    %v1153 = vshrl.u32 %v1152, 7
    %v1154 = vsub.s32 2, %v1153
    %v1155 = vrot.slane %v1142, %v1154
    %v1156 = vlaneseq
    %v1157 = vshrl.u32 %v1156, 7
    %v1158 = vsub.s32 3, %v1157
    %v1159 = vrot.slane %v1142, %v1158
    %v1164 = vmul.f32 %v1133, %v1147
    %v1165 = vmul.f32 %v1129, %v1151
    %v1166 = vmul.f32 %v1125, %v1155
    %v1167 = vmul.f32 %v1137, %v1159
    %v1168 = vmul.f32 %v1134, %v1147
    %v1169 = vmul.f32 %v1130, %v1151
    %v1170 = vmul.f32 %v1126, %v1155
    %v1171 = vmul.f32 %v1138, %v1159
    %v1172 = vmul.f32 %v1135, %v1147
    %v1173 = vmul.f32 %v1131, %v1151
    %v1174 = vmul.f32 %v1127, %v1155
    %v1175 = vmul.f32 %v1139, %v1159
    %v1176 = vmul.f32 %v1136, %v1147
    %v1177 = vmul.f32 %v1132, %v1151
    %v1178 = vmul.f32 %v1128, %v1155
    %v1179 = vmul.f32 %v1140, %v1159
    %1180 = vset.pattern.permute.xlu0 7
    %1181 = vperm.xlu0 %1180, %v235
    %v1182 = vpop.permute.xlu0 %1181
    %1184 = vset.pattern.permute.xlu0 7
    %1185 = vperm.xlu0 %1184, %v236
    %v1186 = vpop.permute.xlu0 %1185
    %1188 = vset.pattern.permute.xlu0 7
    %1189 = vperm.xlu0 %1188, %v237
    %v1190 = vpop.permute.xlu0 %1189
    %1192 = vset.pattern.permute.xlu0 7
    %1193 = vperm.xlu0 %1192, %v238
    %v1194 = vpop.permute.xlu0 %1193
    %v1196 = vmul.f32 %v1164, %v1182
    %v1197 = vmul.f32 %v1165, %v1182
    %v1198 = vmul.f32 %v1166, %v1182
    %v1199 = vmul.f32 %v1167, %v1182
    %v1200 = vmul.f32 %v1168, %v1186
    %v1201 = vmul.f32 %v1169, %v1186
    %v1202 = vmul.f32 %v1170, %v1186
    %v1203 = vmul.f32 %v1171, %v1186
    %v1204 = vmul.f32 %v1172, %v1190
    %v1205 = vmul.f32 %v1173, %v1190
    %v1206 = vmul.f32 %v1174, %v1190
    %v1207 = vmul.f32 %v1175, %v1190
    %v1208 = vmul.f32 %v1176, %v1194
    %v1209 = vmul.f32 %v1177, %v1194
    %v1210 = vmul.f32 %v1178, %v1194
    %v1211 = vmul.f32 %v1179, %v1194
    %v1212 = vadd.f32 %v1076, %v1196
    %v1213 = vadd.f32 %v1077, %v1197
    %v1214 = vadd.f32 %v1078, %v1198
    %v1215 = vadd.f32 %v1079, %v1199
    %v1216 = vadd.f32 %v1080, %v1200
    %v1217 = vadd.f32 %v1081, %v1201
    %v1218 = vadd.f32 %v1082, %v1202
    %v1219 = vadd.f32 %v1083, %v1203
    %v1220 = vadd.f32 %v1084, %v1204
    %v1221 = vadd.f32 %v1085, %v1205
    %v1222 = vadd.f32 %v1086, %v1206
    %v1223 = vadd.f32 %v1087, %v1207
    %v1224 = vadd.f32 %v1088, %v1208
    %v1225 = vadd.f32 %v1089, %v1209
    %v1226 = vadd.f32 %v1090, %v1210
    %v1227 = vadd.f32 %v1091, %v1211
    %1228 = vrot.lane.b32.xlu0 %v219, 111
    %v1229 = vpop.permute.xlu0 %1228
    %1230 = vrot.lane.b32.xlu0 %v223, 111
    %v1231 = vpop.permute.xlu0 %1230
    %1232 = vrot.lane.b32.xlu0 %v227, 111
    %v1233 = vpop.permute.xlu0 %1232
    %1234 = vrot.lane.b32.xlu0 %v231, 111
    %v1235 = vpop.permute.xlu0 %1234
    %1236 = vrot.lane.b32.xlu0 %v220, 111
    %v1237 = vpop.permute.xlu0 %1236
    %1238 = vrot.lane.b32.xlu0 %v224, 111
    %v1239 = vpop.permute.xlu0 %1238
    %1240 = vrot.lane.b32.xlu0 %v228, 111
    %v1241 = vpop.permute.xlu0 %1240
    %1242 = vrot.lane.b32.xlu0 %v232, 111
    %v1243 = vpop.permute.xlu0 %1242
    %1244 = vrot.lane.b32.xlu0 %v221, 111
    %v1245 = vpop.permute.xlu0 %1244
    %1246 = vrot.lane.b32.xlu0 %v225, 111
    %v1247 = vpop.permute.xlu0 %1246
    %1248 = vrot.lane.b32.xlu0 %v229, 111
    %v1249 = vpop.permute.xlu0 %1248
    %1250 = vrot.lane.b32.xlu0 %v233, 111
    %v1251 = vpop.permute.xlu0 %1250
    %1252 = vrot.lane.b32.xlu0 %v222, 111
    %v1253 = vpop.permute.xlu0 %1252
    %1254 = vrot.lane.b32.xlu0 %v226, 111
    %v1255 = vpop.permute.xlu0 %1254
    %1256 = vrot.lane.b32.xlu0 %v230, 111
    %v1257 = vpop.permute.xlu0 %1256
    %1258 = vrot.lane.b32.xlu0 %v234, 111
    %v1259 = vpop.permute.xlu0 %1258
    %vm1260 = vcmp.lt.s32.totalorder %v272, 111
    %v1261 = vsel %vm1260, %v1245, %v1253
    %v1262 = vsel %vm1260, %v1247, %v1255
    %v1263 = vsel %vm1260, %v1249, %v1257
    %v1264 = vsel %vm1260, %v1251, %v1259
    %v1265 = vsel %vm1260, %v1237, %v1245
    %v1266 = vsel %vm1260, %v1239, %v1247
    %v1267 = vsel %vm1260, %v1241, %v1249
    %v1268 = vsel %vm1260, %v1243, %v1251
    %v1269 = vsel %vm1260, %v1229, %v1237
    %v1270 = vsel %vm1260, %v1231, %v1239
    %v1271 = vsel %vm1260, %v1233, %v1241
    %v1272 = vsel %vm1260, %v1235, %v1243
    %v1273 = vsel %vm1260, %v1253, %v1229
    %v1274 = vsel %vm1260, %v1255, %v1231
    %v1275 = vsel %vm1260, %v1257, %v1233
    %v1276 = vsel %vm1260, %v1259, %v1235
    %s1277 = scalar_lea.vmem %s5, 32
    %v1278 = vld [vmem:[%s1277] ss:$8 sm:$0xf]
    %v1280 = vlaneseq
    %v1281 = vshrl.u32 %v1280, 7
    %v1282 = vsub.s32 0, %v1281
    %v1283 = vrot.slane %v1278, %v1282
    %v1284 = vlaneseq
    %v1285 = vshrl.u32 %v1284, 7
    %v1286 = vsub.s32 1, %v1285
    %v1287 = vrot.slane %v1278, %v1286
    %v1288 = vlaneseq
    %v1289 = vshrl.u32 %v1288, 7
    %v1290 = vsub.s32 2, %v1289
    %v1291 = vrot.slane %v1278, %v1290
    %v1292 = vlaneseq
    %v1293 = vshrl.u32 %v1292, 7
    %v1294 = vsub.s32 3, %v1293
    %v1295 = vrot.slane %v1278, %v1294
    %v1300 = vmul.f32 %v1269, %v1283
    %v1301 = vmul.f32 %v1265, %v1287
    %v1302 = vmul.f32 %v1261, %v1291
    %v1303 = vmul.f32 %v1273, %v1295
    %v1304 = vmul.f32 %v1270, %v1283
    %v1305 = vmul.f32 %v1266, %v1287
    %v1306 = vmul.f32 %v1262, %v1291
    %v1307 = vmul.f32 %v1274, %v1295
    %v1308 = vmul.f32 %v1271, %v1283
    %v1309 = vmul.f32 %v1267, %v1287
    %v1310 = vmul.f32 %v1263, %v1291
    %v1311 = vmul.f32 %v1275, %v1295
    %v1312 = vmul.f32 %v1272, %v1283
    %v1313 = vmul.f32 %v1268, %v1287
    %v1314 = vmul.f32 %v1264, %v1291
    %v1315 = vmul.f32 %v1276, %v1295
    %1316 = vset.pattern.permute.xlu0 8
    %1317 = vperm.xlu0 %1316, %v235
    %v1318 = vpop.permute.xlu0 %1317
    %1320 = vset.pattern.permute.xlu0 8
    %1321 = vperm.xlu0 %1320, %v236
    %v1322 = vpop.permute.xlu0 %1321
    %1324 = vset.pattern.permute.xlu0 8
    %1325 = vperm.xlu0 %1324, %v237
    %v1326 = vpop.permute.xlu0 %1325
    %1328 = vset.pattern.permute.xlu0 8
    %1329 = vperm.xlu0 %1328, %v238
    %v1330 = vpop.permute.xlu0 %1329
    %v1332 = vmul.f32 %v1300, %v1318
    %v1333 = vmul.f32 %v1301, %v1318
    %v1334 = vmul.f32 %v1302, %v1318
    %v1335 = vmul.f32 %v1303, %v1318
    %v1336 = vmul.f32 %v1304, %v1322
    %v1337 = vmul.f32 %v1305, %v1322
    %v1338 = vmul.f32 %v1306, %v1322
    %v1339 = vmul.f32 %v1307, %v1322
    %v1340 = vmul.f32 %v1308, %v1326
    %v1341 = vmul.f32 %v1309, %v1326
    %v1342 = vmul.f32 %v1310, %v1326
    %v1343 = vmul.f32 %v1311, %v1326
    %v1344 = vmul.f32 %v1312, %v1330
    %v1345 = vmul.f32 %v1313, %v1330
    %v1346 = vmul.f32 %v1314, %v1330
    %v1347 = vmul.f32 %v1315, %v1330
    %v1348 = vadd.f32 %v1212, %v1332
    %v1349 = vadd.f32 %v1213, %v1333
    %v1350 = vadd.f32 %v1214, %v1334
    %v1351 = vadd.f32 %v1215, %v1335
    %v1352 = vadd.f32 %v1216, %v1336
    %v1353 = vadd.f32 %v1217, %v1337
    %v1354 = vadd.f32 %v1218, %v1338
    %v1355 = vadd.f32 %v1219, %v1339
    %v1356 = vadd.f32 %v1220, %v1340
    %v1357 = vadd.f32 %v1221, %v1341
    %v1358 = vadd.f32 %v1222, %v1342
    %v1359 = vadd.f32 %v1223, %v1343
    %v1360 = vadd.f32 %v1224, %v1344
    %v1361 = vadd.f32 %v1225, %v1345
    %v1362 = vadd.f32 %v1226, %v1346
    %v1363 = vadd.f32 %v1227, %v1347
    %v1364 = vld [vmem:[%s4] sm:$0xff]
    %v1365 = vld [vmem:[%s4 + $0x8] sm:$0xff]
    %v1366 = vld [vmem:[%s4 + $0x10] sm:$0xff]
    %v1367 = vld [vmem:[%s4 + $0x18] sm:$0xff]
    %1369 = vset.pattern.permute.xlu0 0
    %1370 = vperm.xlu0 %1369, %v1364
    %v1371 = vpop.permute.xlu0 %1370
    %1374 = vset.pattern.permute.xlu0 0
    %1375 = vperm.xlu0 %1374, %v1365
    %v1376 = vpop.permute.xlu0 %1375
    %1379 = vset.pattern.permute.xlu0 0
    %1380 = vperm.xlu0 %1379, %v1366
    %v1381 = vpop.permute.xlu0 %1380
    %1384 = vset.pattern.permute.xlu0 0
    %1385 = vperm.xlu0 %1384, %v1367
    %v1386 = vpop.permute.xlu0 %1385
    %v1388 = vadd.f32 %v1348, %v1371
    %v1389 = vadd.f32 %v1349, %v1371
    %v1390 = vadd.f32 %v1350, %v1371
    %v1391 = vadd.f32 %v1351, %v1371
    %v1392 = vadd.f32 %v1352, %v1376
    %v1393 = vadd.f32 %v1353, %v1376
    %v1394 = vadd.f32 %v1354, %v1376
    %v1395 = vadd.f32 %v1355, %v1376
    %v1396 = vadd.f32 %v1356, %v1381
    %v1397 = vadd.f32 %v1357, %v1381
    %v1398 = vadd.f32 %v1358, %v1381
    %v1399 = vadd.f32 %v1359, %v1381
    %v1400 = vadd.f32 %v1360, %v1386
    %v1401 = vadd.f32 %v1361, %v1386
    %v1402 = vadd.f32 %v1362, %v1386
    %v1403 = vadd.f32 %v1363, %v1386
    %v1404 = vmax.f32 %v1388, 0.0
    %v1405 = vmax.f32 %v1389, 0.0
    %v1406 = vmax.f32 %v1390, 0.0
    %v1407 = vmax.f32 %v1391, 0.0
    %v1408 = vmax.f32 %v1392, 0.0
    %v1409 = vmax.f32 %v1393, 0.0
    %v1410 = vmax.f32 %v1394, 0.0
    %v1411 = vmax.f32 %v1395, 0.0
    %v1412 = vmax.f32 %v1396, 0.0
    %v1413 = vmax.f32 %v1397, 0.0
    %v1414 = vmax.f32 %v1398, 0.0
    %v1415 = vmax.f32 %v1399, 0.0
    %v1416 = vmax.f32 %v1400, 0.0
    %v1417 = vmax.f32 %v1401, 0.0
    %v1418 = vmax.f32 %v1402, 0.0
    %v1419 = vmax.f32 %v1403, 0.0
    %v1420 = vld [vmem:[%s10] sm:$0xff]
    %v1422 = vcombine.high %v1420, %v1420
    %v1424 = vunpack.c.l.s4 1983009808
    %v1425 = vunpack.c.0.s8 %v1424
    %v1426 = vlaneseq
    %v1427 = vshrl.u32 %v1426, 7
    %v1428 = vsub.s32 %v1425, %v1427
    %v1429 = vrot.slane %v1420, %v1428
    %v1431 = vunpack.c.l.s4 1983009808
    %v1432 = vunpack.c.0.s8 %v1431
    %v1433 = vlaneseq
    %v1434 = vshrl.u32 %v1433, 7
    %v1435 = vsub.s32 %v1432, %v1434
    %v1436 = vrot.slane %v1422, %v1435
    %v1437 = vcombine.high %v1429, %v1429
    %v1438 = vcombine.high %v1436, %v1436
    %1443 = vmatprep.subr.mxu0 0.0
    %1444 = vmatpush1.xpose.msra.mxu0 0.0
    %1445 = vmatprep.subr.mxu0 0.0
    %1446 = vmatpush1.xpose.msra.mxu0 0.0
    %1447 = vmatprep.subr.mxu0 0.0
    %1448 = vmatpush1.xpose.msra.mxu0 0.0
    %1449 = vmatprep.subr.mxu0 0.0
    %1450 = vmatpush1.xpose.msra.mxu0 0.0
    %1451 = vmatprep.subr.mxu0 0.0
    %1452 = vmatpush1.xpose.msra.mxu0 0.0
    %1453 = vmatprep.subr.mxu0 0.0
    %1454 = vmatpush1.xpose.msra.mxu0 0.0
    %1455 = vmatprep.subr.mxu0 0.0
    %1456 = vmatpush1.xpose.msra.mxu0 0.0
    %1457 = vmatprep.subr.mxu0 0.0
    %1458 = vmatpush1.xpose.msra.mxu0 0.0
    %1459 = vmatprep.subr.mxu0 0.0
    %1460 = vmatpush1.xpose.msra.mxu0 0.0
    %1461 = vmatprep.subr.mxu0 0.0
    %1462 = vmatpush1.xpose.msra.mxu0 0.0
    %1463 = vmatprep.subr.mxu0 0.0
    %1464 = vmatpush1.xpose.msra.mxu0 0.0
    %1465 = vmatprep.subr.mxu0 0.0
    %1466 = vmatpush1.xpose.msra.mxu0 0.0
    %1467 = vmatprep.subr.mxu0 0.0
    %1468 = vmatpush1.xpose.msra.mxu0 0.0
    %1469 = vmatprep.subr.mxu0 0.0
    %1470 = vmatpush1.xpose.msra.mxu0 0.0
    %1471 = vmatprep.subr.mxu0 0.0
    %1472 = vmatpush1.xpose.msra.mxu0 0.0
    %1473 = vmatprep.subr.mxu0 %v1437
    %1474 = vmatpush1.xpose.msra.mxu0 %v1429
    %1475 = vmatprep.subr.mxu0 0.0
    %1476 = vmatpush2.xpose.msra.mxu0 0.0
    %1477 = vmatprep.subr.mxu0 0.0
    %1478 = vmatpush2.xpose.msra.mxu0 0.0
    %1479 = vmatprep.subr.mxu0 0.0
    %1480 = vmatpush2.xpose.msra.mxu0 0.0
    %1481 = vmatprep.subr.mxu0 0.0
    %1482 = vmatpush2.xpose.msra.mxu0 0.0
    %1483 = vmatprep.subr.mxu0 0.0
    %1484 = vmatpush2.xpose.msra.mxu0 0.0
    %1485 = vmatprep.subr.mxu0 0.0
    %1486 = vmatpush2.xpose.msra.mxu0 0.0
    %1487 = vmatprep.subr.mxu0 0.0
    %1488 = vmatpush2.xpose.msra.mxu0 0.0
    %1489 = vmatprep.subr.mxu0 0.0
    %1490 = vmatpush2.xpose.msra.mxu0 0.0
    %1491 = vmatprep.subr.mxu0 0.0
    %1492 = vmatpush2.xpose.msra.mxu0 0.0
    %1493 = vmatprep.subr.mxu0 0.0
    %1494 = vmatpush2.xpose.msra.mxu0 0.0
    %1495 = vmatprep.subr.mxu0 0.0
    %1496 = vmatpush2.xpose.msra.mxu0 0.0
    %1497 = vmatprep.subr.mxu0 0.0
    %1498 = vmatpush2.xpose.msra.mxu0 0.0
    %1499 = vmatprep.subr.mxu0 0.0
    %1500 = vmatpush2.xpose.msra.mxu0 0.0
    %1501 = vmatprep.subr.mxu0 0.0
    %1502 = vmatpush2.xpose.msra.mxu0 0.0
    %1503 = vmatprep.subr.mxu0 0.0
    %1504 = vmatpush2.xpose.msra.mxu0 0.0
    %1505 = vmatprep.subr.mxu0 0.0
    %1506 = vmatpush2.xpose.msra.mxu0 0.0
    %1507 = vmatprep.mubr.f32.mxu0 %v1405
    %1508 = vmatmul.mubr.f32.gmra.mxu0 %v1404
    %v1509 = vpop.f32.mrf.mxu0
    %v1510 = vadd.f32 0.0, %v1509
    %v1511 = vpop.f32.mrf.mxu0
    %1512 = vmatprep.mubr.f32.mxu0 %v1409
    %1513 = vmatmul.mubr.f32.gmra.mxu0 %v1408
    %v1514 = vpop.f32.mrf.mxu0
    %v1515 = vadd.f32 0.0, %v1514
    %v1516 = vpop.f32.mrf.mxu0
    %1517 = vmatprep.mubr.f32.mxu0 %v1413
    %1518 = vmatmul.mubr.f32.gmra.mxu0 %v1412
    %v1519 = vpop.f32.mrf.mxu0
    %v1520 = vadd.f32 0.0, %v1519
    %v1521 = vpop.f32.mrf.mxu0
    %1522 = vmatprep.mubr.f32.mxu0 %v1417
    %1523 = vmatmul.mubr.f32.gmra.mxu0 %v1416
    %v1524 = vpop.f32.mrf.mxu0
    %v1525 = vadd.f32 0.0, %v1524
    %v1526 = vpop.f32.mrf.mxu0
    %1527 = vdwg.mxu0
    %1528 = vmatprep.subr.mxu0 0.0
    %1529 = vmatpush1.xpose.msra.mxu0 0.0
    %1530 = vmatprep.subr.mxu0 0.0
    %1531 = vmatpush1.xpose.msra.mxu0 0.0
    %1532 = vmatprep.subr.mxu0 0.0
    %1533 = vmatpush1.xpose.msra.mxu0 0.0
    %1534 = vmatprep.subr.mxu0 0.0
    %1535 = vmatpush1.xpose.msra.mxu0 0.0
    %1536 = vmatprep.subr.mxu0 0.0
    %1537 = vmatpush1.xpose.msra.mxu0 0.0
    %1538 = vmatprep.subr.mxu0 0.0
    %1539 = vmatpush1.xpose.msra.mxu0 0.0
    %1540 = vmatprep.subr.mxu0 0.0
    %1541 = vmatpush1.xpose.msra.mxu0 0.0
    %1542 = vmatprep.subr.mxu0 0.0
    %1543 = vmatpush1.xpose.msra.mxu0 0.0
    %1544 = vmatprep.subr.mxu0 0.0
    %1545 = vmatpush1.xpose.msra.mxu0 0.0
    %1546 = vmatprep.subr.mxu0 0.0
    %1547 = vmatpush1.xpose.msra.mxu0 0.0
    %1548 = vmatprep.subr.mxu0 0.0
    %1549 = vmatpush1.xpose.msra.mxu0 0.0
    %1550 = vmatprep.subr.mxu0 0.0
    %1551 = vmatpush1.xpose.msra.mxu0 0.0
    %1552 = vmatprep.subr.mxu0 0.0
    %1553 = vmatpush1.xpose.msra.mxu0 0.0
    %1554 = vmatprep.subr.mxu0 0.0
    %1555 = vmatpush1.xpose.msra.mxu0 0.0
    %1556 = vmatprep.subr.mxu0 0.0
    %1557 = vmatpush1.xpose.msra.mxu0 0.0
    %1558 = vmatprep.subr.mxu0 %v1438
    %1559 = vmatpush1.xpose.msra.mxu0 %v1436
    %1560 = vmatprep.subr.mxu0 0.0
    %1561 = vmatpush2.xpose.msra.mxu0 0.0
    %1562 = vmatprep.subr.mxu0 0.0
    %1563 = vmatpush2.xpose.msra.mxu0 0.0
    %1564 = vmatprep.subr.mxu0 0.0
    %1565 = vmatpush2.xpose.msra.mxu0 0.0
    %1566 = vmatprep.subr.mxu0 0.0
    %1567 = vmatpush2.xpose.msra.mxu0 0.0
    %1568 = vmatprep.subr.mxu0 0.0
    %1569 = vmatpush2.xpose.msra.mxu0 0.0
    %1570 = vmatprep.subr.mxu0 0.0
    %1571 = vmatpush2.xpose.msra.mxu0 0.0
    %1572 = vmatprep.subr.mxu0 0.0
    %1573 = vmatpush2.xpose.msra.mxu0 0.0
    %1574 = vmatprep.subr.mxu0 0.0
    %1575 = vmatpush2.xpose.msra.mxu0 0.0
    %1576 = vmatprep.subr.mxu0 0.0
    %1577 = vmatpush2.xpose.msra.mxu0 0.0
    %1578 = vmatprep.subr.mxu0 0.0
    %1579 = vmatpush2.xpose.msra.mxu0 0.0
    %1580 = vmatprep.subr.mxu0 0.0
    %1581 = vmatpush2.xpose.msra.mxu0 0.0
    %1582 = vmatprep.subr.mxu0 0.0
    %1583 = vmatpush2.xpose.msra.mxu0 0.0
    %1584 = vmatprep.subr.mxu0 0.0
    %1585 = vmatpush2.xpose.msra.mxu0 0.0
    %1586 = vmatprep.subr.mxu0 0.0
    %1587 = vmatpush2.xpose.msra.mxu0 0.0
    %1588 = vmatprep.subr.mxu0 0.0
    %1589 = vmatpush2.xpose.msra.mxu0 0.0
    %1590 = vmatprep.subr.mxu0 0.0
    %1591 = vmatpush2.xpose.msra.mxu0 0.0
    %1592 = vmatprep.mubr.f32.mxu0 %v1407
    %1593 = vmatmul.mubr.f32.gmra.mxu0 %v1406
    %v1594 = vpop.f32.mrf.mxu0
    %v1595 = vadd.f32 %v1510, %v1594
    %v1596 = vpop.f32.mrf.mxu0
    %1597 = vmatprep.mubr.f32.mxu0 %v1411
    %1598 = vmatmul.mubr.f32.gmra.mxu0 %v1410
    %v1599 = vpop.f32.mrf.mxu0
    %v1600 = vadd.f32 %v1515, %v1599
    %v1601 = vpop.f32.mrf.mxu0
    %1602 = vmatprep.mubr.f32.mxu0 %v1415
    %1603 = vmatmul.mubr.f32.gmra.mxu0 %v1414
    %v1604 = vpop.f32.mrf.mxu0
    %v1605 = vadd.f32 %v1520, %v1604
    %v1606 = vpop.f32.mrf.mxu0
    %1607 = vmatprep.mubr.f32.mxu0 %v1419
    %1608 = vmatmul.mubr.f32.gmra.mxu0 %v1418
    %v1609 = vpop.f32.mrf.mxu0
    %v1610 = vadd.f32 %v1525, %v1609
    %v1611 = vpop.f32.mrf.mxu0
    %1612 = vdwg.mxu0
    %v1613 = vmul.f32 %v1595, 0.00390625
    %v1614 = vmul.f32 %v1600, 0.00390625
    %v1615 = vmul.f32 %v1605, 0.00390625
    %v1616 = vmul.f32 %v1610, 0.00390625
    %v1617 = vld [vmem:[%s6] sm:$0x3]
    %v1618 = vld [vmem:[%s7] sm:$0x3]
    %1620 = vset.pattern.permute.xlu0 0
    %1621 = vperm.xlu0 %1620, %v1618
    %v1622 = vpop.permute.xlu0 %1621
    %vm1624 = vcmask 261120
    %v1626 = vsel %vm1624, %v1617, 0
    %1628 = vmatprep.subr.mxu0 0.0
    %1629 = vmatpush1.msra.mxu0 0.0
    %1630 = vmatprep.subr.mxu0 0.0
    %1631 = vmatpush1.msra.mxu0 0.0
    %1632 = vmatprep.subr.mxu0 0.0
    %1633 = vmatpush1.msra.mxu0 0.0
    %1634 = vmatprep.subr.mxu0 0.0
    %1635 = vmatpush1.msra.mxu0 0.0
    %1636 = vmatprep.subr.mxu0 0.0
    %1637 = vmatpush1.msra.mxu0 0.0
    %1638 = vmatprep.subr.mxu0 0.0
    %1639 = vmatpush1.msra.mxu0 0.0
    %1640 = vmatprep.subr.mxu0 0.0
    %1641 = vmatpush1.msra.mxu0 0.0
    %1642 = vmatprep.subr.mxu0 0.0
    %1643 = vmatpush1.msra.mxu0 0.0
    %1644 = vmatprep.subr.mxu0 0.0
    %1645 = vmatpush1.msra.mxu0 0.0
    %1646 = vmatprep.subr.mxu0 0.0
    %1647 = vmatpush1.msra.mxu0 0.0
    %1648 = vmatprep.subr.mxu0 0.0
    %1649 = vmatpush1.msra.mxu0 0.0
    %1650 = vmatprep.subr.mxu0 0.0
    %1651 = vmatpush1.msra.mxu0 0.0
    %1652 = vmatprep.subr.mxu0 0.0
    %1653 = vmatpush1.msra.mxu0 %v1616
    %1654 = vmatprep.subr.mxu0 0.0
    %1655 = vmatpush1.msra.mxu0 %v1615
    %1656 = vmatprep.subr.mxu0 0.0
    %1657 = vmatpush1.msra.mxu0 %v1614
    %1658 = vmatprep.subr.mxu0 0.0
    %1659 = vmatpush1.msra.mxu0 %v1613
    %1660 = vmatprep.subr.mxu0 0.0
    %1661 = vmatpush2.msra.mxu0 0.0
    %1662 = vmatprep.subr.mxu0 0.0
    %1663 = vmatpush2.msra.mxu0 0.0
    %1664 = vmatprep.subr.mxu0 0.0
    %1665 = vmatpush2.msra.mxu0 0.0
    %1666 = vmatprep.subr.mxu0 0.0
    %1667 = vmatpush2.msra.mxu0 0.0
    %1668 = vmatprep.subr.mxu0 0.0
    %1669 = vmatpush2.msra.mxu0 0.0
    %1670 = vmatprep.subr.mxu0 0.0
    %1671 = vmatpush2.msra.mxu0 0.0
    %1672 = vmatprep.subr.mxu0 0.0
    %1673 = vmatpush2.msra.mxu0 0.0
    %1674 = vmatprep.subr.mxu0 0.0
    %1675 = vmatpush2.msra.mxu0 0.0
    %1676 = vmatprep.subr.mxu0 0.0
    %1677 = vmatpush2.msra.mxu0 0.0
    %1678 = vmatprep.subr.mxu0 0.0
    %1679 = vmatpush2.msra.mxu0 0.0
    %1680 = vmatprep.subr.mxu0 0.0
    %1681 = vmatpush2.msra.mxu0 0.0
    %1682 = vmatprep.subr.mxu0 0.0
    %1683 = vmatpush2.msra.mxu0 0.0
    %1684 = vmatprep.subr.mxu0 0.0
    %1685 = vmatpush2.msra.mxu0 0.0
    %1686 = vmatprep.subr.mxu0 0.0
    %1687 = vmatpush2.msra.mxu0 0.0
    %1688 = vmatprep.subr.mxu0 0.0
    %1689 = vmatpush2.msra.mxu0 0.0
    %1690 = vmatprep.subr.mxu0 0.0
    %1691 = vmatpush2.msra.mxu0 0.0
    %1692 = vmatprep.mubr.f32.mxu0 0.0
    %1693 = vmatmul.mubr.f32.gmra.mxu0 %v1626
    %v1694 = vpop.f32.mrf.mxu0
    %v1695 = vadd.f32 %v1622, %v1694
    %v1696 = vpop.f32.mrf.mxu0
    %1697 = vdwg.mxu0
    %v1698 = vmax.f32 %v1695, 0.0
    %v1699 = vld [vmem:[%s8] sm:$0xff]
    %v1700 = vld [vmem:[%s8 + $0x8] sm:$0xff]
    %v1701 = vld [vmem:[%s8 + $0x10] sm:$0xff]
    %v1702 = vld [vmem:[%s8 + $0x18] sm:$0xff]
    %1704 = vset.pattern.permute.xlu0 0
    %1705 = vperm.xlu0 %1704, %v1699
    %v1706 = vpop.permute.xlu0 %1705
    %1709 = vset.pattern.permute.xlu0 0
    %1710 = vperm.xlu0 %1709, %v1700
    %v1711 = vpop.permute.xlu0 %1710
    %1714 = vset.pattern.permute.xlu0 0
    %1715 = vperm.xlu0 %1714, %v1701
    %v1716 = vpop.permute.xlu0 %1715
    %1719 = vset.pattern.permute.xlu0 0
    %1720 = vperm.xlu0 %1719, %v1702
    %v1721 = vpop.permute.xlu0 %1720
    %v1723 = vlaneseq
    %v1724 = vshrl.u32 %v1723, 7
    %v1725 = vsub.s32 0, %v1724
    %v1726 = vrot.slane %v1698, %v1725
    %v1727 = vmul.f32 %v1706, %v1726
    %v1728 = vmul.f32 %v1711, %v1726
    %v1729 = vmul.f32 %v1716, %v1726
    %v1730 = vmul.f32 %v1721, %v1726
    %1731 = vset.pattern.permute.xlu0 1
    %1732 = vperm.xlu0 %1731, %v1699
    %v1733 = vpop.permute.xlu0 %1732
    %1735 = vset.pattern.permute.xlu0 1
    %1736 = vperm.xlu0 %1735, %v1700
    %v1737 = vpop.permute.xlu0 %1736
    %1739 = vset.pattern.permute.xlu0 1
    %1740 = vperm.xlu0 %1739, %v1701
    %v1741 = vpop.permute.xlu0 %1740
    %1743 = vset.pattern.permute.xlu0 1
    %1744 = vperm.xlu0 %1743, %v1702
    %v1745 = vpop.permute.xlu0 %1744
    %v1747 = vlaneseq
    %v1748 = vshrl.u32 %v1747, 7
    %v1749 = vsub.s32 1, %v1748
    %v1750 = vrot.slane %v1698, %v1749
    %v1751 = vmul.f32 %v1733, %v1750
    %v1752 = vmul.f32 %v1737, %v1750
    %v1753 = vmul.f32 %v1741, %v1750
    %v1754 = vmul.f32 %v1745, %v1750
    %v1755 = vadd.f32 %v1727, %v1751
    %v1756 = vadd.f32 %v1728, %v1752
    %v1757 = vadd.f32 %v1729, %v1753
    %v1758 = vadd.f32 %v1730, %v1754
    %v1759 = vld [vmem:[%s9] sm:$0xff]
    %v1760 = vld [vmem:[%s9 + $0x8] sm:$0xff]
    %v1761 = vld [vmem:[%s9 + $0x10] sm:$0xff]
    %v1762 = vld [vmem:[%s9 + $0x18] sm:$0xff]
    %1764 = vset.pattern.permute.xlu0 0
    %1765 = vperm.xlu0 %1764, %v1759
    %v1766 = vpop.permute.xlu0 %1765
    %1769 = vset.pattern.permute.xlu0 0
    %1770 = vperm.xlu0 %1769, %v1760
    %v1771 = vpop.permute.xlu0 %1770
    %1774 = vset.pattern.permute.xlu0 0
    %1775 = vperm.xlu0 %1774, %v1761
    %v1776 = vpop.permute.xlu0 %1775
    %1779 = vset.pattern.permute.xlu0 0
    %1780 = vperm.xlu0 %1779, %v1762
    %v1781 = vpop.permute.xlu0 %1780
    %v1783 = vadd.f32 %v1755, %v1766
    %v1784 = vadd.f32 %v1756, %v1771
    %v1785 = vadd.f32 %v1757, %v1776
    %v1786 = vadd.f32 %v1758, %v1781
    %v1787 = vxor.u32 %v1783, 2147483648
    %v1788 = vxor.u32 %v1784, 2147483648
    %v1789 = vxor.u32 %v1785, 2147483648
    %v1790 = vxor.u32 %v1786, 2147483648
    %v1791 = vmul.f32 %v1787, 1.442695
    %v1792 = vpow.pop %v1791
    %v1793 = vmul.f32 %v1788, 1.442695
    %v1794 = vpow.pop %v1793
    %v1795 = vmul.f32 %v1789, 1.442695
    %v1796 = vpow.pop %v1795
    %v1797 = vmul.f32 %v1790, 1.442695
    %v1798 = vpow.pop %v1797
    %v1799 = vadd.f32 %v1792, 1.0
    %v1800 = vadd.f32 %v1794, 1.0
    %v1801 = vadd.f32 %v1796, 1.0
    %v1802 = vadd.f32 %v1798, 1.0
    %v1803 = vrcp.pop %v1799
    %v1804 = vmul.f32 1.0, %v1803
    %v1805 = vrcp.pop %v1800
    %v1806 = vmul.f32 1.0, %v1805
    %v1807 = vrcp.pop %v1801
    %v1808 = vmul.f32 1.0, %v1807
    %v1809 = vrcp.pop %v1802
    %v1810 = vmul.f32 1.0, %v1809
    %v1811 = vld [vmem:[%s10] ss:$2 sm:$0xf]
    %1813 = vset.pattern.permute.xlu0 0
    %1814 = vperm.xlu0 %1813, %v1804
    %v1815 = vpop.permute.xlu0 %1814
    %1818 = vset.pattern.permute.xlu0 0
    %1819 = vperm.xlu0 %1818, %v1806
    %v1820 = vpop.permute.xlu0 %1819
    %1823 = vset.pattern.permute.xlu0 0
    %1824 = vperm.xlu0 %1823, %v1808
    %v1825 = vpop.permute.xlu0 %1824
    %1828 = vset.pattern.permute.xlu0 0
    %1829 = vperm.xlu0 %1828, %v1810
    %v1830 = vpop.permute.xlu0 %1829
    %v1833 = vlaneseq
    %v1834 = vshrl.u32 %v1833, 7
    %v1835 = vsub.s32 0, %v1834
    %v1836 = vrot.slane %v1811, %v1835
    %v1837 = vlaneseq
    %v1838 = vshrl.u32 %v1837, 7
    %v1839 = vsub.s32 1, %v1838
    %v1840 = vrot.slane %v1811, %v1839
    %v1841 = vlaneseq
    %v1842 = vshrl.u32 %v1841, 7
    %v1843 = vsub.s32 2, %v1842
    %v1844 = vrot.slane %v1811, %v1843
    %v1845 = vlaneseq
    %v1846 = vshrl.u32 %v1845, 7
    %v1847 = vsub.s32 3, %v1846
    %v1848 = vrot.slane %v1811, %v1847
    %v1853 = vmul.f32 %v1815, %v1836
    %v1854 = vmul.f32 %v1815, %v1840
    %v1855 = vmul.f32 %v1815, %v1844
    %v1856 = vmul.f32 %v1815, %v1848
    %v1857 = vmul.f32 %v1820, %v1836
    %v1858 = vmul.f32 %v1820, %v1840
    %v1859 = vmul.f32 %v1820, %v1844
    %v1860 = vmul.f32 %v1820, %v1848
    %v1861 = vmul.f32 %v1825, %v1836
    %v1862 = vmul.f32 %v1825, %v1840
    %v1863 = vmul.f32 %v1825, %v1844
    %v1864 = vmul.f32 %v1825, %v1848
    %v1865 = vmul.f32 %v1830, %v1836
    %v1866 = vmul.f32 %v1830, %v1840
    %v1867 = vmul.f32 %v1830, %v1844
    %v1868 = vmul.f32 %v1830, %v1848
    %s1869 = scalar_lea.vmem %s10, 1
    %v1870 = vld [vmem:[%s1869] ss:$2 sm:$0xf]
    %1871 = vset.pattern.permute.xlu0 1
    %1872 = vperm.xlu0 %1871, %v1804
    %v1873 = vpop.permute.xlu0 %1872
    %1875 = vset.pattern.permute.xlu0 1
    %1876 = vperm.xlu0 %1875, %v1806
    %v1877 = vpop.permute.xlu0 %1876
    %1879 = vset.pattern.permute.xlu0 1
    %1880 = vperm.xlu0 %1879, %v1808
    %v1881 = vpop.permute.xlu0 %1880
    %1883 = vset.pattern.permute.xlu0 1
    %1884 = vperm.xlu0 %1883, %v1810
    %v1885 = vpop.permute.xlu0 %1884
    %v1888 = vlaneseq
    %v1889 = vshrl.u32 %v1888, 7
    %v1890 = vsub.s32 0, %v1889
    %v1891 = vrot.slane %v1870, %v1890
    %v1892 = vlaneseq
    %v1893 = vshrl.u32 %v1892, 7
    %v1894 = vsub.s32 1, %v1893
    %v1895 = vrot.slane %v1870, %v1894
    %v1896 = vlaneseq
    %v1897 = vshrl.u32 %v1896, 7
    %v1898 = vsub.s32 2, %v1897
    %v1899 = vrot.slane %v1870, %v1898
    %v1900 = vlaneseq
    %v1901 = vshrl.u32 %v1900, 7
    %v1902 = vsub.s32 3, %v1901
    %v1903 = vrot.slane %v1870, %v1902
    %v1908 = vmul.f32 %v1873, %v1891
    %v1909 = vmul.f32 %v1873, %v1895
    %v1910 = vmul.f32 %v1873, %v1899
    %v1911 = vmul.f32 %v1873, %v1903
    %v1912 = vmul.f32 %v1877, %v1891
    %v1913 = vmul.f32 %v1877, %v1895
    %v1914 = vmul.f32 %v1877, %v1899
    %v1915 = vmul.f32 %v1877, %v1903
    %v1916 = vmul.f32 %v1881, %v1891
    %v1917 = vmul.f32 %v1881, %v1895
    %v1918 = vmul.f32 %v1881, %v1899
    %v1919 = vmul.f32 %v1881, %v1903
    %v1920 = vmul.f32 %v1885, %v1891
    %v1921 = vmul.f32 %v1885, %v1895
    %v1922 = vmul.f32 %v1885, %v1899
    %v1923 = vmul.f32 %v1885, %v1903
    %v1924 = vadd.f32 %v1853, %v1908
    %v1925 = vadd.f32 %v1854, %v1909
    %v1926 = vadd.f32 %v1855, %v1910
    %v1927 = vadd.f32 %v1856, %v1911
    %v1928 = vadd.f32 %v1857, %v1912
    %v1929 = vadd.f32 %v1858, %v1913
    %v1930 = vadd.f32 %v1859, %v1914
    %v1931 = vadd.f32 %v1860, %v1915
    %v1932 = vadd.f32 %v1861, %v1916
    %v1933 = vadd.f32 %v1862, %v1917
    %v1934 = vadd.f32 %v1863, %v1918
    %v1935 = vadd.f32 %v1864, %v1919
    %v1936 = vadd.f32 %v1865, %v1920
    %v1937 = vadd.f32 %v1866, %v1921
    %v1938 = vadd.f32 %v1867, %v1922
    %v1939 = vadd.f32 %v1868, %v1923
    %v1940 = vmul.f32 %v1404, %v1924
    %v1941 = vmul.f32 %v1405, %v1925
    %v1942 = vmul.f32 %v1406, %v1926
    %v1943 = vmul.f32 %v1407, %v1927
    %v1944 = vmul.f32 %v1408, %v1928
    %v1945 = vmul.f32 %v1409, %v1929
    %v1946 = vmul.f32 %v1410, %v1930
    %v1947 = vmul.f32 %v1411, %v1931
    %v1948 = vmul.f32 %v1412, %v1932
    %v1949 = vmul.f32 %v1413, %v1933
    %v1950 = vmul.f32 %v1414, %v1934
    %v1951 = vmul.f32 %v1415, %v1935
    %v1952 = vmul.f32 %v1416, %v1936
    %v1953 = vmul.f32 %v1417, %v1937
    %v1954 = vmul.f32 %v1418, %v1938
    %v1955 = vmul.f32 %v1419, %v1939
    %v1956 = vld [vmem:[%s11] sm:$0xf]
    %v1957 = vpack.c.bf16 %v1944, %v1940
    %v1958 = vpack.c.bf16 %v1945, %v1941
    %v1959 = vpack.c.bf16 %v1946, %v1942
    %v1960 = vpack.c.bf16 %v1947, %v1943
    %v1961 = vpack.c.bf16 %v1952, %v1948
    %v1962 = vpack.c.bf16 %v1953, %v1949
    %v1963 = vpack.c.bf16 %v1954, %v1950
    %v1964 = vpack.c.bf16 %v1955, %v1951
    %v1965 = vld [vmem:[%s12] sm:$0xff]
    %1967 = vset.pattern.permute.xlu0 0
    %1968 = vperm.xlu0 %1967, %v1965
    %v1969 = vpop.permute.xlu0 %1968
    %v1972 = vsel %vm1624, %v1956, 0
    %1974 = vmatprep.subr.bf16.mxu0 0
    %1975 = vmatpush1.bf16.msra.mxu0 0
    %1976 = vmatprep.subr.bf16.mxu0 0
    %1977 = vmatpush1.bf16.msra.mxu0 0
    %1978 = vmatprep.subr.bf16.mxu0 0
    %1979 = vmatpush1.bf16.msra.mxu0 0
    %1980 = vmatprep.subr.bf16.mxu0 0
    %1981 = vmatpush1.bf16.msra.mxu0 0
    %1982 = vmatprep.subr.bf16.mxu0 0
    %1983 = vmatpush1.bf16.msra.mxu0 0
    %1984 = vmatprep.subr.bf16.mxu0 0
    %1985 = vmatpush1.bf16.msra.mxu0 0
    %1986 = vmatprep.subr.bf16.mxu0 %v1962
    %1987 = vmatpush1.bf16.msra.mxu0 %v1961
    %1988 = vmatprep.subr.bf16.mxu0 %v1958
    %1989 = vmatpush1.bf16.msra.mxu0 %v1957
    %1990 = vmatprep.subr.bf16.mxu0 0
    %1991 = vmatpush2.bf16.msra.mxu0 0
    %1992 = vmatprep.subr.bf16.mxu0 0
    %1993 = vmatpush2.bf16.msra.mxu0 0
    %1994 = vmatprep.subr.bf16.mxu0 0
    %1995 = vmatpush2.bf16.msra.mxu0 0
    %1996 = vmatprep.subr.bf16.mxu0 0
    %1997 = vmatpush2.bf16.msra.mxu0 0
    %1998 = vmatprep.subr.bf16.mxu0 0
    %1999 = vmatpush2.bf16.msra.mxu0 0
    %2000 = vmatprep.subr.bf16.mxu0 0
    %2001 = vmatpush2.bf16.msra.mxu0 0
    %2002 = vmatprep.subr.bf16.mxu0 0
    %2003 = vmatpush2.bf16.msra.mxu0 0
    %2004 = vmatprep.subr.bf16.mxu0 0
    %2005 = vmatpush2.bf16.msra.mxu0 0
    %2006 = vmatprep.mubr.bf16.mxu0 0
    %2007 = vmatmul.mubr.bf16.gmra.mxu0 %v1972
    %v2008 = vpop.f32.mrf.mxu0
    %v2009 = vadd.f32 %v1969, %v2008
    %v2010 = vpop.f32.mrf.mxu0
    %v2011 = vadd.f32 %v1969, %v2010
    %v2012 = vpop.f32.mrf.mxu0
    %v2013 = vpop.f32.mrf.mxu0
    %2014 = vdwg.mxu0
    %2015 = vmatprep.subr.bf16.mxu0 0
    %2016 = vmatpush1.bf16.msra.mxu0 0
    %2017 = vmatprep.subr.bf16.mxu0 0
    %2018 = vmatpush1.bf16.msra.mxu0 0
    %2019 = vmatprep.subr.bf16.mxu0 0
    %2020 = vmatpush1.bf16.msra.mxu0 0
    %2021 = vmatprep.subr.bf16.mxu0 0
    %2022 = vmatpush1.bf16.msra.mxu0 0
    %2023 = vmatprep.subr.bf16.mxu0 0
    %2024 = vmatpush1.bf16.msra.mxu0 0
    %2025 = vmatprep.subr.bf16.mxu0 0
    %2026 = vmatpush1.bf16.msra.mxu0 0
    %2027 = vmatprep.subr.bf16.mxu0 %v1964
    %2028 = vmatpush1.bf16.msra.mxu0 %v1963
    %2029 = vmatprep.subr.bf16.mxu0 %v1960
    %2030 = vmatpush1.bf16.msra.mxu0 %v1959
    %2031 = vmatprep.subr.bf16.mxu0 0
    %2032 = vmatpush2.bf16.msra.mxu0 0
    %2033 = vmatprep.subr.bf16.mxu0 0
    %2034 = vmatpush2.bf16.msra.mxu0 0
    %2035 = vmatprep.subr.bf16.mxu0 0
    %2036 = vmatpush2.bf16.msra.mxu0 0
    %2037 = vmatprep.subr.bf16.mxu0 0
    %2038 = vmatpush2.bf16.msra.mxu0 0
    %2039 = vmatprep.subr.bf16.mxu0 0
    %2040 = vmatpush2.bf16.msra.mxu0 0
    %2041 = vmatprep.subr.bf16.mxu0 0
    %2042 = vmatpush2.bf16.msra.mxu0 0
    %2043 = vmatprep.subr.bf16.mxu0 0
    %2044 = vmatpush2.bf16.msra.mxu0 0
    %2045 = vmatprep.subr.bf16.mxu0 0
    %2046 = vmatpush2.bf16.msra.mxu0 0
    %2047 = vmatprep.mubr.bf16.mxu0 0
    %2048 = vmatmul.mubr.bf16.gmra.mxu0 %v1972
    %v2049 = vpop.f32.mrf.mxu0
    %v2050 = vadd.f32 %v1969, %v2049
    %v2051 = vpop.f32.mrf.mxu0
    %v2052 = vadd.f32 %v1969, %v2051
    %v2053 = vpop.f32.mrf.mxu0
    %v2054 = vpop.f32.mrf.mxu0
    %2055 = vdwg.mxu0
    %v2056 = vadd.f32 %v2009, %v46
    %v2057 = vadd.f32 %v2011, %v47
    %v2058 = vadd.f32 %v2050, %v49
    %v2059 = vadd.f32 %v2052, %v50
    %2060 = vst [vmem:[#allocation2] sm:$0xff] %v2056
    %2061 = vst [vmem:[#allocation2 + $0x8] sm:$0xff] %v2057
    %s2062 = scalar_lea.vmem [#allocation2], 16
    %2063 = vst [vmem:[%s2062] sm:$0xff] %v2058
    %2064 = vst [vmem:[%s2062 + $0x8] sm:$0xff] %v2059
    // Predicated region
    $region54: #{tpu_custom_call.1} parent=1 // pred_check
      _
    $region55: #{tpu_custom_call.1} parent=1 // pred_check_branch
      %2066 = sbr.rel (0) target = $region57
    $region56: #{tpu_custom_call.1} parent=1 // pred_region
      %s2068 = ssub.s32 512, 512
      %2069 = vsyncadd [#allocation3], %s2068
      %s2070 = sshll.u32 [#allocation2], 4
      %s2071 = int_to_ptr.vmem [resolvable:$true] %s2070
      %2076 = dma.vmem_to_hbm [thread:$0]  %s2071, 512, %s13, [#allocation3], 256, 256, 16
    $region57: #{tpu_custom_call.1} parent=1 // pred_fallthru
      _
    // Predicated region
    $region58: #{tpu_custom_call.1} parent=1 // pred_check
      _
    $region59: #{tpu_custom_call.1} parent=1 // pred_check_branch
      %2078 = sbr.rel (0) target = $region61
    $region60: #{tpu_custom_call.1} parent=1 // pred_region
      %2079 = dma.done [#allocation3], 512
    $region61: #{tpu_custom_call.1} parent=1 // pred_fallthru
      _
    %2080 = vsyncpa [#allocation3], 1

</llo_original>
